<compile_context>
chip_gen: v7x
topology: tpu7x:2x2x1
jax: 0.10.0
libtpu: 0.0.40
codegen_flags: <defaults>
</compile_context>

<pallas_src>
import functools

import jax
import jax.numpy as jnp
import numpy as np
from jax import lax
from jax.experimental import pallas as pl
from jax.experimental.pallas import tpu as pltpu

_LANES = 128


def _round_up(v: int, m: int) -> int:
    return ((v + m - 1) // m) * m


def _vmem_capacity_bytes() -> int:
    """Physical per-core VMEM of the local TPU generation (conservative fallback)."""
    try:
        info = pltpu.get_tpu_info()
        for attr in ("vmem_capacity_bytes", "vmem_bytes", "vmem_size_bytes"):
            cap = getattr(info, attr, None)
            if cap:
                return int(cap)
    except Exception:
        pass
    return 64 * 1024 * 1024  # v7x-sized lower bound: safe on every generation


def _hard_margin_kernel(lab_ref, x_ref, y_ref, out_ref,
                        dist_ref, pcnt_ref, ncnt_ref, psum_ref, nsum_ref,
                        pmax_ref, nmin_ref, *, margin: float, rpt: int):
    pid = pl.program_id(0)
    last = pl.num_programs(0) - 1

    ninf = jnp.float32(-jnp.inf)
    pinf = jnp.float32(jnp.inf)

    # ---- one-time init of the resident per-lane accumulators -----------------
    @pl.when(pid == 0)
    def _():
        zeros = jnp.zeros((1, _LANES), jnp.float32)
        pcnt_ref[...] = zeros
        ncnt_ref[...] = zeros
        psum_ref[...] = zeros
        nsum_ref[...] = zeros
        pmax_ref[...] = jnp.full((1, _LANES), ninf, jnp.float32)
        nmin_ref[...] = jnp.full((1, _LANES), pinf, jnp.float32)

    # ---- streaming phase: lane-dense cosine distance for this row tile -------
    d_model = x_ref.shape[-1]
    # (tile_n, D) -> (rpt, 128, D): pure leading-dim split (no data movement);
    # the axis=-1 reductions then produce a lane-dense (rpt, 128) result.
    x = x_ref[...].astype(jnp.float32).reshape(rpt, _LANES, d_model)
    y = y_ref[...].astype(jnp.float32).reshape(rpt, _LANES, d_model)

    eps2 = jnp.float32(1e-16)                            # (1e-8) ** 2
    dot = jnp.sum(x * y, axis=-1)                        # (rpt, 128)
    sxx = jnp.sum(x * x, axis=-1)
    syy = jnp.sum(y * y, axis=-1)
    # 1 / max(||x||, eps) == rsqrt(max(||x||^2, eps^2)); rsqrt runs on the idle EUP.
    inv_nx = lax.rsqrt(jnp.maximum(sxx, eps2))
    inv_ny = lax.rsqrt(jnp.maximum(syy, eps2))
    dist = 1.0 - dot * inv_nx * inv_ny                   # (rpt, 128)

    row0 = pl.multiple_of(pid * rpt, rpt)
    lab_t = lab_ref[pl.ds(row0, rpt), :]                 # (rpt, 128) int32, pad = -1
    pos = lab_t == 1
    neg = lab_t == 0
    valid = jnp.logical_or(pos, neg)
    dist = jnp.where(valid, dist, 0.0)                   # sanitize padded / OOB rows
    dist_ref[pl.ds(row0, rpt), :] = dist                 # lane-dense store

    # Fold the threshold-prerequisite reductions into the streaming phase so they
    # hide under the next tile's DMA (per-lane partials; combined in the epilogue).
    posf = pos.astype(jnp.float32)
    negf = neg.astype(jnp.float32)
    pcnt_ref[...] += jnp.sum(posf, axis=0, keepdims=True)
    ncnt_ref[...] += jnp.sum(negf, axis=0, keepdims=True)
    psum_ref[...] += jnp.sum(dist * posf, axis=0, keepdims=True)
    nsum_ref[...] += jnp.sum(dist * negf, axis=0, keepdims=True)
    pmax_ref[...] = jnp.maximum(
        pmax_ref[...], jnp.max(jnp.where(pos, dist, ninf), axis=0, keepdims=True))
    nmin_ref[...] = jnp.minimum(
        nmin_ref[...], jnp.min(jnp.where(neg, dist, pinf), axis=0, keepdims=True))

    # ---- epilogue (last grid step): thresholds + masked hinge reductions ------
    @pl.when(pid == last)
    def _():
        n_pos = jnp.sum(pcnt_ref[...], keepdims=True)     # (1, 1)
        n_neg = jnp.sum(ncnt_ref[...], keepdims=True)
        pos_sum = jnp.sum(psum_ref[...], keepdims=True)
        neg_sum = jnp.sum(nsum_ref[...], keepdims=True)
        pos_max = jnp.max(pmax_ref[...], keepdims=True)
        neg_min = jnp.min(nmin_ref[...], keepdims=True)

        pos_mean = pos_sum / jnp.maximum(n_pos, 1.0)
        neg_mean = neg_sum / jnp.maximum(n_neg, 1.0)
        # thresholds: poss.max() if len(poss) > 1 else negs.mean()  (and vice versa)
        thr_neg = jnp.where(n_pos > 1.0, pos_max, neg_mean)   # (1, 1)
        thr_pos = jnp.where(n_neg > 1.0, neg_min, pos_mean)   # (1, 1)

        d = dist_ref[...]                                 # (n_groups, 128) f32
        lab = lab_ref[...]                                # (n_groups, 128) i32
        pos_all = lab == 1
        neg_all = lab == 0
        pos_sel = jnp.logical_and(pos_all, d > thr_pos)
        neg_sel = jnp.logical_and(neg_all, d < thr_neg)

        positive_loss = jnp.sum(jnp.where(pos_sel, d * d, 0.0), keepdims=True)
        hinge = jnp.maximum(jnp.float32(margin) - d, 0.0)
        negative_loss = jnp.sum(jnp.where(neg_sel, hinge * hinge, 0.0), keepdims=True)
        out_ref[...] = positive_loss + negative_loss


def hard_margin_loss(rep_des, hidden, labels, *, margin: float = 0.5, tile_n=None):
    """Pallas TPU implementation of HardMarginLoss with the COSINE_DISTANCE metric."""
    rep_des = jnp.asarray(rep_des)
    hidden = jnp.asarray(hidden)
    labels = jnp.asarray(labels)

    N, D = rep_des.shape
    if hidden.shape != (N, D):
        raise ValueError(f"hidden shape {hidden.shape} must match rep_des shape {(N, D)}")
    if labels.shape[0] != N:
        raise ValueError(f"Labels shape {labels.shape} must match distance_matrix shape {(N,)}")

    # ---- generation-aware tiling policy --------------------------------------
    vmem_cap = _vmem_capacity_bytes()
    vmem_limit = min(100 * 1024 * 1024, max(32 * 1024 * 1024, int(vmem_cap * 0.65)))
    tile_bytes_target = 8 * 1024 * 1024 if vmem_cap >= 96 * 1024 * 1024 else 5 * 1024 * 1024

    # Budget left after the lane-dense dist scratch + label block (~4 B/row each),
    # shared between 2 inputs x 2 pipeline buffers + f32 temporaries.
    resident_guess = 8 * (_round_up(N, _LANES) + 32 * 1024)
    avail = max(vmem_limit - resident_guess - (4 << 20), 2 << 20)
    tile_bytes = min(tile_bytes_target, avail // 8)

    bytes_per_row = max(1, D * rep_des.dtype.itemsize)
    if tile_n is None:
        tile_n = tile_bytes // bytes_per_row
    tile_n = (int(tile_n) // _LANES) * _LANES
    tile_n = max(_LANES, min(tile_n, _round_up(N, _LANES)))

    num_tiles = -(-N // tile_n)
    n_pad = num_tiles * tile_n
    n_groups = n_pad // _LANES
    rpt = tile_n // _LANES

    # Pad inputs only when a single tile exceeds the whole input (cheap, < 1 tile);
    # multi-tile ragged tails are handled as partial blocks and masked via label -1.
    if tile_n > N:
        rep_des = jnp.pad(rep_des, ((0, tile_n - N), (0, 0)))
        hidden = jnp.pad(hidden, ((0, tile_n - N), (0, 0)))

    # Lane-dense labels: row r -> (r // 128, r % 128); padded rows get label -1.
    lab = jnp.full((n_pad,), -1, dtype=jnp.int32)
    lab = lab.at[:N].set(labels.reshape(N).astype(jnp.int32))
    lab = lab.reshape(n_groups, _LANES)

    # TODO(synk): on v7x, split the row tiles across the two TensorCores
    # (core-parallel leading axis + per-core partial accumulators combined in a tiny
    # second phase) to use both TCs' HBM bandwidth; kept single-core for portability.
    # TODO(synk): for bf16 inputs on v7x, offload the dot/sxx/syy row reductions to
    # the idle MXU if the XLU/VALU slots become binding at 3.2 TB/s.
    kernel = functools.partial(_hard_margin_kernel, margin=float(margin), rpt=rpt)
    out = pl.pallas_call(
        kernel,
        out_shape=jax.ShapeDtypeStruct((1, 1), jnp.float32),
        grid=(num_tiles,),
        in_specs=[
            pl.BlockSpec((n_groups, _LANES), lambda i: (0, 0)),  # lane-dense labels (resident)
            pl.BlockSpec((tile_n, D), lambda i: (i, 0)),         # rep_des row tile
            pl.BlockSpec((tile_n, D), lambda i: (i, 0)),         # hidden  row tile
        ],
        out_specs=pl.BlockSpec((1, 1), lambda i: (0, 0)),
        scratch_shapes=[
            pltpu.VMEM((n_groups, _LANES), jnp.float32),  # per-row distances (lane-dense)
            pltpu.VMEM((1, _LANES), jnp.float32),         # pos count partials
            pltpu.VMEM((1, _LANES), jnp.float32),         # neg count partials
            pltpu.VMEM((1, _LANES), jnp.float32),         # pos sum partials
            pltpu.VMEM((1, _LANES), jnp.float32),         # neg sum partials
            pltpu.VMEM((1, _LANES), jnp.float32),         # pos max partials
            pltpu.VMEM((1, _LANES), jnp.float32),         # neg min partials
        ],
        compiler_params=pltpu.CompilerParams(
            dimension_semantics=("arbitrary",),           # sequential accumulation axis
            vmem_limit_bytes=vmem_limit,
        ),
    )(lab, rep_des, hidden)
    return out[0, 0]


def _reference_loss(rep_des, hidden, labels, margin=0.5):
    # Plain-numpy reference mirroring the PyTorch semantics.
    x = np.asarray(rep_des, np.float32)
    y = np.asarray(hidden, np.float32)
    lab = np.asarray(labels)
    eps = 1e-8
    cos = (x * y).sum(-1) / (
        np.maximum(np.linalg.norm(x, axis=-1), eps)
        * np.maximum(np.linalg.norm(y, axis=-1), eps)
    )
    dist = 1.0 - cos
    negs = dist[lab == 0]
    poss = dist[lab == 1]
    thr_neg = poss.max() if len(poss) > 1 else negs.mean()
    thr_pos = negs.min() if len(negs) > 1 else poss.mean()
    negative_pairs = negs[negs < thr_neg]
    positive_pairs = poss[poss > thr_pos]
    positive_loss = (positive_pairs ** 2).sum()
    negative_loss = (np.maximum(margin - negative_pairs, 0.0) ** 2).sum()
    return np.float32(positive_loss + negative_loss)


if __name__ == "__main__":
    key = jax.random.PRNGKey(0)
    k1, k2, k3, k4 = jax.random.split(key, 4)

    # Case 1: tiny single-tile problem (8 pairs, hidden dim 32) -> padded to one 128-row tile.
    N1, D1 = 8, 32
    rep1 = jax.random.normal(k1, (N1, D1), dtype=jnp.float32)
    hid1 = jax.random.normal(k2, (N1, D1), dtype=jnp.float32)
    lab1 = jnp.array([0, 1, 0, 1, 0, 1, 0, 1], dtype=jnp.int32)
    loss1 = jax.block_until_ready(hard_margin_loss(rep1, hid1, lab1, margin=0.5))
    ref1 = _reference_loss(rep1, hid1, lab1, margin=0.5)
    assert np.allclose(np.asarray(loss1), ref1, rtol=1e-4, atol=1e-5), (loss1, ref1)

    # Case 2: multi-tile grid with a ragged tail (N=300 not a multiple of tile_n=128).
    N2, D2 = 300, 256
    rep2 = jax.random.normal(k3, (N2, D2), dtype=jnp.float32)
    hid2 = jax.random.normal(k4, (N2, D2), dtype=jnp.float32)
    lab2 = (jnp.arange(N2) % 2).astype(jnp.int32)
    loss2 = jax.block_until_ready(hard_margin_loss(rep2, hid2, lab2, margin=0.5, tile_n=128))
    ref2 = _reference_loss(rep2, hid2, lab2, margin=0.5)
    assert np.allclose(np.asarray(loss2), ref2, rtol=1e-4, atol=1e-5), (loss2, ref2)

    print("KERNEL_OK")
</pallas_src>

<mosaic_0001>
module attributes {stable_mosaic.version = 11 : i64} {
  func.func @_hard_margin_kernel(%arg0: i32, %arg1: memref<1x128xi32, #tpu.memory_space<vmem>>, %arg2: memref<128x32xf32, #tpu.memory_space<vmem>>, %arg3: memref<128x32xf32, #tpu.memory_space<vmem>>, %arg4: memref<1x1xf32, #tpu.memory_space<vmem>>, %arg5: memref<1x128xf32, #tpu.memory_space<vmem>>, %arg6: memref<1x128xf32, #tpu.memory_space<vmem>>, %arg7: memref<1x128xf32, #tpu.memory_space<vmem>>, %arg8: memref<1x128xf32, #tpu.memory_space<vmem>>, %arg9: memref<1x128xf32, #tpu.memory_space<vmem>>, %arg10: memref<1x128xf32, #tpu.memory_space<vmem>>, %arg11: memref<1x128xf32, #tpu.memory_space<vmem>>) attributes {dimension_semantics = [#tpu.dimension_semantics<arbitrary>], iteration_bounds = array<i64: 1>, scalar_prefetch = 0 : i64, scratch_operands = 7 : i64, tpu.core_type = #tpu.core_type<tc>, window_params = [{pipeline_mode = #tpu.pipeline_mode<synchronous>, transform_indices = @transform_0, window_bounds = array<i64: 1, 128>}, {transform_indices = @transform_1, window_bounds = array<i64: 128, 32>}, {transform_indices = @transform_2, window_bounds = array<i64: 128, 32>}, {pipeline_mode = #tpu.pipeline_mode<synchronous>, transform_indices = @transform_3, window_bounds = array<i64: 1, 1>}]} {
    %c0_i32 = arith.constant 0 : i32
    %0 = arith.cmpi eq, %arg0, %c0_i32 : i32
    %1 = arith.extui %0 : i1 to i32
    %cst = arith.constant 0xFF800000 : f32
    %cst_0 = arith.constant 0x7F800000 : f32
    %c0_i32_1 = arith.constant 0 : i32
    %2 = arith.cmpi ne, %1, %c0_i32_1 : i32
    scf.if %2 {
      %cst_50 = arith.constant 0.000000e+00 : f32
      %79 = vector.broadcast %cst_50 : f32 to vector<1x128xf32>
      %c0_51 = arith.constant 0 : index
      %c0_52 = arith.constant 0 : index
      %80 = vector.load %arg6[%c0_51, %c0_52] : memref<1x128xf32, #tpu.memory_space<vmem>>, vector<1x128xf32>
      tpu.vector_store %arg6[%c0_51, %c0_52], %79 {strides = array<i32>} : memref<1x128xf32, #tpu.memory_space<vmem>>, vector<1x128xf32>,
      %c0_53 = arith.constant 0 : index
      %c0_54 = arith.constant 0 : index
      %81 = vector.load %arg7[%c0_53, %c0_54] : memref<1x128xf32, #tpu.memory_space<vmem>>, vector<1x128xf32>
      tpu.vector_store %arg7[%c0_53, %c0_54], %79 {strides = array<i32>} : memref<1x128xf32, #tpu.memory_space<vmem>>, vector<1x128xf32>,
      %c0_55 = arith.constant 0 : index
      %c0_56 = arith.constant 0 : index
      %82 = vector.load %arg8[%c0_55, %c0_56] : memref<1x128xf32, #tpu.memory_space<vmem>>, vector<1x128xf32>
      tpu.vector_store %arg8[%c0_55, %c0_56], %79 {strides = array<i32>} : memref<1x128xf32, #tpu.memory_space<vmem>>, vector<1x128xf32>,
      %c0_57 = arith.constant 0 : index
      %c0_58 = arith.constant 0 : index
      %83 = vector.load %arg9[%c0_57, %c0_58] : memref<1x128xf32, #tpu.memory_space<vmem>>, vector<1x128xf32>
      tpu.vector_store %arg9[%c0_57, %c0_58], %79 {strides = array<i32>} : memref<1x128xf32, #tpu.memory_space<vmem>>, vector<1x128xf32>,
      %84 = vector.broadcast %cst : f32 to vector<1x128xf32>
      %c0_59 = arith.constant 0 : index
      %c0_60 = arith.constant 0 : index
      %85 = vector.load %arg10[%c0_59, %c0_60] : memref<1x128xf32, #tpu.memory_space<vmem>>, vector<1x128xf32>
      tpu.vector_store %arg10[%c0_59, %c0_60], %84 {strides = array<i32>} : memref<1x128xf32, #tpu.memory_space<vmem>>, vector<1x128xf32>,
      %86 = vector.broadcast %cst_0 : f32 to vector<1x128xf32>
      %c0_61 = arith.constant 0 : index
      %c0_62 = arith.constant 0 : index
      %87 = vector.load %arg11[%c0_61, %c0_62] : memref<1x128xf32, #tpu.memory_space<vmem>>, vector<1x128xf32>
      tpu.vector_store %arg11[%c0_61, %c0_62], %86 {strides = array<i32>} : memref<1x128xf32, #tpu.memory_space<vmem>>, vector<1x128xf32>,
    } else {
    }
    %c0 = arith.constant 0 : index
    %c0_2 = arith.constant 0 : index
    %3 = vector.load %arg2[%c0, %c0_2] : memref<128x32xf32, #tpu.memory_space<vmem>>, vector<128x32xf32>
    %4 = vector.shape_cast %3 : vector<128x32xf32> to vector<1x128x32xf32>
    %c0_3 = arith.constant 0 : index
    %c0_4 = arith.constant 0 : index
    %5 = vector.load %arg3[%c0_3, %c0_4] : memref<128x32xf32, #tpu.memory_space<vmem>>, vector<128x32xf32>
    %6 = vector.shape_cast %5 : vector<128x32xf32> to vector<1x128x32xf32>
    %7 = arith.mulf %4, %6 : vector<1x128x32xf32>
    %cst_5 = arith.constant dense<0.000000e+00> : vector<1x128xf32>
    %8 = vector.multi_reduction <add>, %7, %cst_5 [2] : vector<1x128x32xf32> to vector<1x128xf32>
    %9 = arith.mulf %4, %4 : vector<1x128x32xf32>
    %cst_6 = arith.constant dense<0.000000e+00> : vector<1x128xf32>
    %10 = vector.multi_reduction <add>, %9, %cst_6 [2] : vector<1x128x32xf32> to vector<1x128xf32>
    %11 = arith.mulf %6, %6 : vector<1x128x32xf32>
    %cst_7 = arith.constant dense<0.000000e+00> : vector<1x128xf32>
    %12 = vector.multi_reduction <add>, %11, %cst_7 [2] : vector<1x128x32xf32> to vector<1x128xf32>
    %cst_8 = arith.constant 1.000000e-16 : f32
    %13 = vector.broadcast %cst_8 : f32 to vector<1x128xf32>
    %14 = arith.maximumf %10, %13 : vector<1x128xf32>
    %15 = math.rsqrt %14 : vector<1x128xf32>
    %cst_9 = arith.constant 1.000000e-16 : f32
    %16 = vector.broadcast %cst_9 : f32 to vector<1x128xf32>
    %17 = arith.maximumf %12, %16 : vector<1x128xf32>
    %18 = math.rsqrt %17 : vector<1x128xf32>
    %19 = arith.mulf %8, %15 : vector<1x128xf32>
    %20 = arith.mulf %19, %18 : vector<1x128xf32>
    %cst_10 = arith.constant 1.000000e+00 : f32
    %21 = vector.broadcast %cst_10 : f32 to vector<1x128xf32>
    %22 = arith.subf %21, %20 : vector<1x128xf32>
    %c1_i32 = arith.constant 1 : i32
    %23 = arith.muli %arg0, %c1_i32 : i32
    %24 = tpu.assume_multiple %23, 1 : i32
    %25 = arith.index_cast %24 : i32 to index
    %c0_11 = arith.constant 0 : index
    %26 = vector.load %arg1[%25, %c0_11] : memref<1x128xi32, #tpu.memory_space<vmem>>, vector<1x128xi32>
    %c1_i32_12 = arith.constant 1 : i32
    %27 = vector.broadcast %c1_i32_12 : i32 to vector<1x128xi32>
    %28 = arith.cmpi eq, %26, %27 : vector<1x128xi32>
    %c0_i32_13 = arith.constant 0 : i32
    %29 = vector.broadcast %c0_i32_13 : i32 to vector<1x128xi32>
    %30 = arith.cmpi eq, %26, %29 : vector<1x128xi32>
    %31 = arith.ori %28, %30 : vector<1x128xi1>
    %cst_14 = arith.constant 0.000000e+00 : f32
    %32 = vector.broadcast %cst_14 : f32 to vector<1x128xf32>
    %33 = arith.select %31, %22, %32 : vector<1x128xi1>, vector<1x128xf32>
    %34 = arith.index_cast %24 : i32 to index
    %c0_15 = arith.constant 0 : index
    %35 = vector.load %arg5[%34, %c0_15] : memref<1x128xf32, #tpu.memory_space<vmem>>, vector<1x128xf32>
    tpu.vector_store %arg5[%34, %c0_15], %33 {strides = array<i32>} : memref<1x128xf32, #tpu.memory_space<vmem>>, vector<1x128xf32>,
    %36 = arith.extui %28 : vector<1x128xi1> to vector<1x128xi32>
    %37 = arith.sitofp %36 : vector<1x128xi32> to vector<1x128xf32>
    %38 = arith.extui %30 : vector<1x128xi1> to vector<1x128xi32>
    %39 = arith.sitofp %38 : vector<1x128xi32> to vector<1x128xf32>
    %c0_16 = arith.constant 0 : index
    %c0_17 = arith.constant 0 : index
    %40 = vector.load %arg6[%c0_16, %c0_17] : memref<1x128xf32, #tpu.memory_space<vmem>>, vector<1x128xf32>
    %cst_18 = arith.constant dense<0.000000e+00> : vector<128xf32>
    %41 = vector.multi_reduction <add>, %37, %cst_18 [0] : vector<1x128xf32> to vector<128xf32>
    %42 = vector.shape_cast %41 : vector<128xf32> to vector<1x128xf32>
    %43 = arith.addf %40, %42 : vector<1x128xf32>
    %c0_19 = arith.constant 0 : index
    %c0_20 = arith.constant 0 : index
    %44 = vector.load %arg6[%c0_19, %c0_20] : memref<1x128xf32, #tpu.memory_space<vmem>>, vector<1x128xf32>
    tpu.vector_store %arg6[%c0_19, %c0_20], %43 {strides = array<i32>} : memref<1x128xf32, #tpu.memory_space<vmem>>, vector<1x128xf32>,
    %c0_21 = arith.constant 0 : index
    %c0_22 = arith.constant 0 : index
    %45 = vector.load %arg7[%c0_21, %c0_22] : memref<1x128xf32, #tpu.memory_space<vmem>>, vector<1x128xf32>
    %cst_23 = arith.constant dense<0.000000e+00> : vector<128xf32>
    %46 = vector.multi_reduction <add>, %39, %cst_23 [0] : vector<1x128xf32> to vector<128xf32>
    %47 = vector.shape_cast %46 : vector<128xf32> to vector<1x128xf32>
    %48 = arith.addf %45, %47 : vector<1x128xf32>
    %c0_24 = arith.constant 0 : index
    %c0_25 = arith.constant 0 : index
    %49 = vector.load %arg7[%c0_24, %c0_25] : memref<1x128xf32, #tpu.memory_space<vmem>>, vector<1x128xf32>
    tpu.vector_store %arg7[%c0_24, %c0_25], %48 {strides = array<i32>} : memref<1x128xf32, #tpu.memory_space<vmem>>, vector<1x128xf32>,
    %c0_26 = arith.constant 0 : index
    %c0_27 = arith.constant 0 : index
    %50 = vector.load %arg8[%c0_26, %c0_27] : memref<1x128xf32, #tpu.memory_space<vmem>>, vector<1x128xf32>
    %51 = arith.mulf %33, %37 : vector<1x128xf32>
    %cst_28 = arith.constant dense<0.000000e+00> : vector<128xf32>
    %52 = vector.multi_reduction <add>, %51, %cst_28 [0] : vector<1x128xf32> to vector<128xf32>
    %53 = vector.shape_cast %52 : vector<128xf32> to vector<1x128xf32>
    %54 = arith.addf %50, %53 : vector<1x128xf32>
    %c0_29 = arith.constant 0 : index
    %c0_30 = arith.constant 0 : index
    %55 = vector.load %arg8[%c0_29, %c0_30] : memref<1x128xf32, #tpu.memory_space<vmem>>, vector<1x128xf32>
    tpu.vector_store %arg8[%c0_29, %c0_30], %54 {strides = array<i32>} : memref<1x128xf32, #tpu.memory_space<vmem>>, vector<1x128xf32>,
    %c0_31 = arith.constant 0 : index
    %c0_32 = arith.constant 0 : index
    %56 = vector.load %arg9[%c0_31, %c0_32] : memref<1x128xf32, #tpu.memory_space<vmem>>, vector<1x128xf32>
    %57 = arith.mulf %33, %39 : vector<1x128xf32>
    %cst_33 = arith.constant dense<0.000000e+00> : vector<128xf32>
    %58 = vector.multi_reduction <add>, %57, %cst_33 [0] : vector<1x128xf32> to vector<128xf32>
    %59 = vector.shape_cast %58 : vector<128xf32> to vector<1x128xf32>
    %60 = arith.addf %56, %59 : vector<1x128xf32>
    %c0_34 = arith.constant 0 : index
    %c0_35 = arith.constant 0 : index
    %61 = vector.load %arg9[%c0_34, %c0_35] : memref<1x128xf32, #tpu.memory_space<vmem>>, vector<1x128xf32>
    tpu.vector_store %arg9[%c0_34, %c0_35], %60 {strides = array<i32>} : memref<1x128xf32, #tpu.memory_space<vmem>>, vector<1x128xf32>,
    %c0_36 = arith.constant 0 : index
    %c0_37 = arith.constant 0 : index
    %62 = vector.load %arg10[%c0_36, %c0_37] : memref<1x128xf32, #tpu.memory_space<vmem>>, vector<1x128xf32>
    %cst_38 = arith.constant 0xFF800000 : f32
    %63 = vector.broadcast %cst_38 : f32 to vector<1x128xf32>
    %64 = arith.select %28, %33, %63 : vector<1x128xi1>, vector<1x128xf32>
    %cst_39 = arith.constant dense<0xFF800000> : vector<128xf32>
    %65 = vector.multi_reduction <maximumf>, %64, %cst_39 [0] : vector<1x128xf32> to vector<128xf32>
    %66 = vector.shape_cast %65 : vector<128xf32> to vector<1x128xf32>
    %67 = arith.maximumf %62, %66 : vector<1x128xf32>
    %c0_40 = arith.constant 0 : index
    %c0_41 = arith.constant 0 : index
    %68 = vector.load %arg10[%c0_40, %c0_41] : memref<1x128xf32, #tpu.memory_space<vmem>>, vector<1x128xf32>
    tpu.vector_store %arg10[%c0_40, %c0_41], %67 {strides = array<i32>} : memref<1x128xf32, #tpu.memory_space<vmem>>, vector<1x128xf32>,
    %c0_42 = arith.constant 0 : index
    %c0_43 = arith.constant 0 : index
    %69 = vector.load %arg11[%c0_42, %c0_43] : memref<1x128xf32, #tpu.memory_space<vmem>>, vector<1x128xf32>
    %cst_44 = arith.constant 0x7F800000 : f32
    %70 = vector.broadcast %cst_44 : f32 to vector<1x128xf32>
    %71 = arith.select %30, %33, %70 : vector<1x128xi1>, vector<1x128xf32>
    %cst_45 = arith.constant dense<0x7F800000> : vector<128xf32>
    %72 = vector.multi_reduction <minimumf>, %71, %cst_45 [0] : vector<1x128xf32> to vector<128xf32>
    %73 = vector.shape_cast %72 : vector<128xf32> to vector<1x128xf32>
    %74 = arith.minimumf %69, %73 : vector<1x128xf32>
    %c0_46 = arith.constant 0 : index
    %c0_47 = arith.constant 0 : index
    %75 = vector.load %arg11[%c0_46, %c0_47] : memref<1x128xf32, #tpu.memory_space<vmem>>, vector<1x128xf32>
    tpu.vector_store %arg11[%c0_46, %c0_47], %74 {strides = array<i32>} : memref<1x128xf32, #tpu.memory_space<vmem>>, vector<1x128xf32>,
    %c0_i32_48 = arith.constant 0 : i32
    %76 = arith.cmpi eq, %arg0, %c0_i32_48 : i32
    %77 = arith.extui %76 : i1 to i32
    %c0_i32_49 = arith.constant 0 : i32
    %78 = arith.cmpi ne, %77, %c0_i32_49 : i32
    scf.if %78 {
      %c0_50 = arith.constant 0 : index
      %c0_51 = arith.constant 0 : index
      %79 = vector.load %arg6[%c0_50, %c0_51] : memref<1x128xf32, #tpu.memory_space<vmem>>, vector<1x128xf32>
      %80 = vector.shape_cast %79 : vector<1x128xf32> to vector<1x1x128xf32>
      %cst_52 = arith.constant dense<0.000000e+00> : vector<1xf32>
      %81 = vector.multi_reduction <add>, %80, %cst_52 [1, 2] : vector<1x1x128xf32> to vector<1xf32>
      %82 = vector.shape_cast %81 : vector<1xf32> to vector<1x1x1xf32>
      %83 = vector.extract %82[0, 0, 0] : f32 from vector<1x1x1xf32>
      %84 = vector.broadcast %83 : f32 to vector<1x1xf32>
      %c0_53 = arith.constant 0 : index
      %c0_54 = arith.constant 0 : index
      %85 = vector.load %arg7[%c0_53, %c0_54] : memref<1x128xf32, #tpu.memory_space<vmem>>, vector<1x128xf32>
      %86 = vector.shape_cast %85 : vector<1x128xf32> to vector<1x1x128xf32>
      %cst_55 = arith.constant dense<0.000000e+00> : vector<1xf32>
      %87 = vector.multi_reduction <add>, %86, %cst_55 [1, 2] : vector<1x1x128xf32> to vector<1xf32>
      %88 = vector.shape_cast %87 : vector<1xf32> to vector<1x1x1xf32>
      %89 = vector.extract %88[0, 0, 0] : f32 from vector<1x1x1xf32>
      %90 = vector.broadcast %89 : f32 to vector<1x1xf32>
      %c0_56 = arith.constant 0 : index
      %c0_57 = arith.constant 0 : index
      %91 = vector.load %arg8[%c0_56, %c0_57] : memref<1x128xf32, #tpu.memory_space<vmem>>, vector<1x128xf32>
      %92 = vector.shape_cast %91 : vector<1x128xf32> to vector<1x1x128xf32>
      %cst_58 = arith.constant dense<0.000000e+00> : vector<1xf32>
      %93 = vector.multi_reduction <add>, %92, %cst_58 [1, 2] : vector<1x1x128xf32> to vector<1xf32>
      %94 = vector.shape_cast %93 : vector<1xf32> to vector<1x1x1xf32>
      %95 = vector.extract %94[0, 0, 0] : f32 from vector<1x1x1xf32>
      %96 = vector.broadcast %95 : f32 to vector<1x1xf32>
      %c0_59 = arith.constant 0 : index
      %c0_60 = arith.constant 0 : index
      %97 = vector.load %arg9[%c0_59, %c0_60] : memref<1x128xf32, #tpu.memory_space<vmem>>, vector<1x128xf32>
      %98 = vector.shape_cast %97 : vector<1x128xf32> to vector<1x1x128xf32>
      %cst_61 = arith.constant dense<0.000000e+00> : vector<1xf32>
      %99 = vector.multi_reduction <add>, %98, %cst_61 [1, 2] : vector<1x1x128xf32> to vector<1xf32>
      %100 = vector.shape_cast %99 : vector<1xf32> to vector<1x1x1xf32>
      %101 = vector.extract %100[0, 0, 0] : f32 from vector<1x1x1xf32>
      %102 = vector.broadcast %101 : f32 to vector<1x1xf32>
      %c0_62 = arith.constant 0 : index
      %c0_63 = arith.constant 0 : index
      %103 = vector.load %arg10[%c0_62, %c0_63] : memref<1x128xf32, #tpu.memory_space<vmem>>, vector<1x128xf32>
      %104 = vector.shape_cast %103 : vector<1x128xf32> to vector<1x1x128xf32>
      %cst_64 = arith.constant dense<0xFF800000> : vector<1xf32>
      %105 = vector.multi_reduction <maximumf>, %104, %cst_64 [1, 2] : vector<1x1x128xf32> to vector<1xf32>
      %106 = vector.shape_cast %105 : vector<1xf32> to vector<1x1x1xf32>
      %107 = vector.extract %106[0, 0, 0] : f32 from vector<1x1x1xf32>
      %108 = vector.broadcast %107 : f32 to vector<1x1xf32>
      %c0_65 = arith.constant 0 : index
      %c0_66 = arith.constant 0 : index
      %109 = vector.load %arg11[%c0_65, %c0_66] : memref<1x128xf32, #tpu.memory_space<vmem>>, vector<1x128xf32>
      %110 = vector.shape_cast %109 : vector<1x128xf32> to vector<1x1x128xf32>
      %cst_67 = arith.constant dense<0x7F800000> : vector<1xf32>
      %111 = vector.multi_reduction <minimumf>, %110, %cst_67 [1, 2] : vector<1x1x128xf32> to vector<1xf32>
      %112 = vector.shape_cast %111 : vector<1xf32> to vector<1x1x1xf32>
      %113 = vector.extract %112[0, 0, 0] : f32 from vector<1x1x1xf32>
      %114 = vector.broadcast %113 : f32 to vector<1x1xf32>
      %cst_68 = arith.constant 1.000000e+00 : f32
      %115 = vector.broadcast %cst_68 : f32 to vector<1x1xf32>
      %116 = arith.maximumf %84, %115 : vector<1x1xf32>
      %117 = arith.divf %96, %116 : vector<1x1xf32>
      %cst_69 = arith.constant 1.000000e+00 : f32
      %118 = vector.broadcast %cst_69 : f32 to vector<1x1xf32>
      %119 = arith.maximumf %90, %118 : vector<1x1xf32>
      %120 = arith.divf %102, %119 : vector<1x1xf32>
      %cst_70 = arith.constant 1.000000e+00 : f32
      %121 = vector.broadcast %cst_70 : f32 to vector<1x1xf32>
      %122 = arith.cmpf ogt, %84, %121 : vector<1x1xf32>
      %123 = arith.select %122, %108, %120 : vector<1x1xi1>, vector<1x1xf32>
      %cst_71 = arith.constant 1.000000e+00 : f32
      %124 = vector.broadcast %cst_71 : f32 to vector<1x1xf32>
      %125 = arith.cmpf ogt, %90, %124 : vector<1x1xf32>
      %126 = arith.select %125, %114, %117 : vector<1x1xi1>, vector<1x1xf32>
      %c0_72 = arith.constant 0 : index
      %c0_73 = arith.constant 0 : index
      %127 = vector.load %arg5[%c0_72, %c0_73] : memref<1x128xf32, #tpu.memory_space<vmem>>, vector<1x128xf32>
      %c0_74 = arith.constant 0 : index
      %c0_75 = arith.constant 0 : index
      %128 = vector.load %arg1[%c0_74, %c0_75] : memref<1x128xi32, #tpu.memory_space<vmem>>, vector<1x128xi32>
      %c1_i32_76 = arith.constant 1 : i32
      %129 = vector.broadcast %c1_i32_76 : i32 to vector<1x128xi32>
      %130 = arith.cmpi eq, %128, %129 : vector<1x128xi32>
      %c0_i32_77 = arith.constant 0 : i32
      %131 = vector.broadcast %c0_i32_77 : i32 to vector<1x128xi32>
      %132 = arith.cmpi eq, %128, %131 : vector<1x128xi32>
      %133 = vector.broadcast %126 : vector<1x1xf32> to vector<1x128xf32>
      %134 = arith.cmpf ogt, %127, %133 : vector<1x128xf32>
      %135 = arith.andi %130, %134 : vector<1x128xi1>
      %136 = vector.broadcast %123 : vector<1x1xf32> to vector<1x128xf32>
      %137 = arith.cmpf olt, %127, %136 : vector<1x128xf32>
      %138 = arith.andi %132, %137 : vector<1x128xi1>
      %139 = arith.mulf %127, %127 : vector<1x128xf32>
      %cst_78 = arith.constant 0.000000e+00 : f32
      %140 = vector.broadcast %cst_78 : f32 to vector<1x128xf32>
      %141 = arith.select %135, %139, %140 : vector<1x128xi1>, vector<1x128xf32>
      %142 = vector.shape_cast %141 : vector<1x128xf32> to vector<1x1x128xf32>
      %cst_79 = arith.constant dense<0.000000e+00> : vector<1xf32>
      %143 = vector.multi_reduction <add>, %142, %cst_79 [1, 2] : vector<1x1x128xf32> to vector<1xf32>
      %144 = vector.shape_cast %143 : vector<1xf32> to vector<1x1x1xf32>
      %145 = vector.extract %144[0, 0, 0] : f32 from vector<1x1x1xf32>
      %146 = vector.broadcast %145 : f32 to vector<1x1xf32>
      %cst_80 = arith.constant 5.000000e-01 : f32
      %147 = vector.broadcast %cst_80 : f32 to vector<1x128xf32>
      %148 = arith.subf %147, %127 : vector<1x128xf32>
      %cst_81 = arith.constant 0.000000e+00 : f32
      %149 = vector.broadcast %cst_81 : f32 to vector<1x128xf32>
      %150 = arith.maximumf %148, %149 : vector<1x128xf32>
      %151 = arith.mulf %150, %150 : vector<1x128xf32>
      %cst_82 = arith.constant 0.000000e+00 : f32
      %152 = vector.broadcast %cst_82 : f32 to vector<1x128xf32>
      %153 = arith.select %138, %151, %152 : vector<1x128xi1>, vector<1x128xf32>
      %154 = vector.shape_cast %153 : vector<1x128xf32> to vector<1x1x128xf32>
      %cst_83 = arith.constant dense<0.000000e+00> : vector<1xf32>
      %155 = vector.multi_reduction <add>, %154, %cst_83 [1, 2] : vector<1x1x128xf32> to vector<1xf32>
      %156 = vector.shape_cast %155 : vector<1xf32> to vector<1x1x1xf32>
      %157 = vector.extract %156[0, 0, 0] : f32 from vector<1x1x1xf32>
      %158 = vector.broadcast %157 : f32 to vector<1x1xf32>
      %159 = arith.addf %146, %158 : vector<1x1xf32>
      %c0_84 = arith.constant 0 : index
      %c0_85 = arith.constant 0 : index
      %160 = vector.load %arg4[%c0_84, %c0_85] : memref<1x1xf32, #tpu.memory_space<vmem>>, vector<1x1xf32>
      tpu.vector_store %arg4[%c0_84, %c0_85], %159 {strides = array<i32>} : memref<1x1xf32, #tpu.memory_space<vmem>>, vector<1x1xf32>,
    } else {
    }
    return
  }
  func.func @transform_0(%arg0: i32) -> (i32, i32) {
    %c0_i32 = arith.constant 0 : i32
    %c0_i32_0 = arith.constant 0 : i32
    %c0_i32_1 = arith.constant 0 : i32
    return %c0_i32, %c0_i32_0 : i32, i32
  }
  func.func @transform_1(%arg0: i32) -> (i32, i32) {
    %c0_i32 = arith.constant 0 : i32
    %c0_i32_0 = arith.constant 0 : i32
    return %arg0, %c0_i32 : i32, i32
  }
  func.func @transform_2(%arg0: i32) -> (i32, i32) {
    %c0_i32 = arith.constant 0 : i32
    %c0_i32_0 = arith.constant 0 : i32
    return %arg0, %c0_i32 : i32, i32
  }
  func.func @transform_3(%arg0: i32) -> (i32, i32) {
    %c0_i32 = arith.constant 0 : i32
    %c0_i32_0 = arith.constant 0 : i32
    %c0_i32_1 = arith.constant 0 : i32
    return %c0_i32, %c0_i32_0 : i32, i32
  }
}

</mosaic_0001>

<llo_original>
// kernel: tpu_custom_call.1
$region0: #{tpu_custom_call.1}
  #allocation0 [shape = 'u32[]', space=smem, size = 0x4, offset = 0x4, fixed_abs, tag = 'smem constant byte address 0x4 - core index']
  #allocation1 [shape = 'u32[144,128]{1,0:T(1,128)}', space=vmem, size = 0x12000, scoped, tag = 'internal scratch']
  #allocation2 [shape = 'f32[1,128]{1,0:T(1,128)}', space=vmem, size = 0x200, scoped, tag = 'scratch operand']
  #allocation3 [shape = 'f32[1,128]{1,0:T(1,128)}', space=vmem, size = 0x200, scoped, tag = 'scratch operand']
  #allocation4 [shape = 'f32[1,128]{1,0:T(1,128)}', space=vmem, size = 0x200, scoped, tag = 'scratch operand']
  #allocation5 [shape = 'f32[1,128]{1,0:T(1,128)}', space=vmem, size = 0x200, scoped, tag = 'scratch operand']
  #allocation6 [shape = 'f32[1,128]{1,0:T(1,128)}', space=vmem, size = 0x200, scoped, tag = 'scratch operand']
  #allocation7 [shape = 'f32[1,128]{1,0:T(1,128)}', space=vmem, size = 0x200, scoped, tag = 'scratch operand']
  #allocation8 [shape = 'f32[1,128]{1,0:T(1,128)}', space=vmem, size = 0x200, scoped, tag = 'scratch operand']
  %s0 = inlined_call_operand.vmem [shape: s32[1,128], index: 0, kind: input, shape index: {}]
  %s1 = inlined_call_operand.vmem [shape: f32[128,32], index: 1, kind: input, shape index: {}]
  %s2 = inlined_call_operand.vmem [shape: f32[128,32], index: 2, kind: input, shape index: {}]
  %s3 = inlined_call_operand.hbm [shape: f32[1,1], index: 3, kind: output, shape index: {}]
  %s4 = sld [smem:[#allocation0]]
  $region30: #{tpu_custom_call.1} parent=0
    _
  %s6 = ssub.s32 1, %s4
  %s7 = scalar_select 0, %s6, %s4
  $region1: #{tpu_custom_call.1} parent=0
    #allocation9 [shape = 'u8[512]{0}', space=vmem, size = 0x400, scoped, tag = 'output window, operand 0, single buffered']
    #allocation10 [shape = 's32[1]{0}', space=sflag, size = 0x4, scoped, tag = 'scoped memory for tpu_custom_call.1']
    %8 = vsyncpa [#allocation10], 0
    // Predicated region
    $region2: #{tpu_custom_call.1} parent=1 // pred_check
      _
    $region3: #{tpu_custom_call.1} parent=1 // pred_check_branch
      %10 = sbr.rel (0) target = $region5
    $region4: #{tpu_custom_call.1} parent=1 // pred_region
      _
    $region5: #{tpu_custom_call.1} parent=1 // pred_fallthru
      _
    // Predicated region
    $region6: #{tpu_custom_call.1} parent=1 // pred_check
      _
    $region7: #{tpu_custom_call.1} parent=1 // pred_check_branch
      %12 = sbr.rel (0) target = $region9
    $region8: #{tpu_custom_call.1} parent=1 // pred_region
      _
    $region9: #{tpu_custom_call.1} parent=1 // pred_fallthru
      _
    // Predicated region
    $region10: #{tpu_custom_call.1} parent=1 // pred_check
      _
    $region11: #{tpu_custom_call.1} parent=1 // pred_check_branch
      %14 = sbr.rel (0) target = $region13
    $region12: #{tpu_custom_call.1} parent=1 // pred_region
      _
    $region13: #{tpu_custom_call.1} parent=1 // pred_fallthru
      _
    %p15 = scmp.eq.s32.totalorder 0, 0
    // Predicated region
    $region14: #{tpu_custom_call.1} parent=1 // pred_check
      %p16 = pneg %p15
    $region15: #{tpu_custom_call.1} parent=1 // pred_check_branch
      %18 = sbr.rel (%p16) target = $region17
    $region16: #{tpu_custom_call.1} parent=1 // pred_region
      %19 = vst [vmem:[#allocation3] sm:$0x1] 0.0
      %20 = vst [vmem:[#allocation4] sm:$0x1] 0.0
      %21 = vst [vmem:[#allocation5] sm:$0x1] 0.0
      %22 = vst [vmem:[#allocation6] sm:$0x1] 0.0
      %23 = vst [vmem:[#allocation7] sm:$0x1] -inf
      %24 = vst [vmem:[#allocation8] sm:$0x1] inf
    $region17: #{tpu_custom_call.1} parent=1 // pred_fallthru
      _
    %v25 = vld [vmem:[%s1] sm:$0xff]
    %v26 = vld [vmem:[%s1 + $0x8] sm:$0xff]
    %v27 = vld [vmem:[%s1 + $0x10] sm:$0xff]
    %v28 = vld [vmem:[%s1 + $0x18] sm:$0xff]
    %v29 = vld [vmem:[%s1 + $0x20] sm:$0xff]
    %v30 = vld [vmem:[%s1 + $0x28] sm:$0xff]
    %v31 = vld [vmem:[%s1 + $0x30] sm:$0xff]
    %v32 = vld [vmem:[%s1 + $0x38] sm:$0xff]
    %v33 = vld [vmem:[%s1 + $0x40] sm:$0xff]
    %v34 = vld [vmem:[%s1 + $0x48] sm:$0xff]
    %v35 = vld [vmem:[%s1 + $0x50] sm:$0xff]
    %v36 = vld [vmem:[%s1 + $0x58] sm:$0xff]
    %v37 = vld [vmem:[%s1 + $0x60] sm:$0xff]
    %v38 = vld [vmem:[%s1 + $0x68] sm:$0xff]
    %v39 = vld [vmem:[%s1 + $0x70] sm:$0xff]
    %v40 = vld [vmem:[%s1 + $0x78] sm:$0xff]
    %v41 = vld [vmem:[%s2] sm:$0xff]
    %v42 = vld [vmem:[%s2 + $0x8] sm:$0xff]
    %v43 = vld [vmem:[%s2 + $0x10] sm:$0xff]
    %v44 = vld [vmem:[%s2 + $0x18] sm:$0xff]
    %v45 = vld [vmem:[%s2 + $0x20] sm:$0xff]
    %v46 = vld [vmem:[%s2 + $0x28] sm:$0xff]
    %v47 = vld [vmem:[%s2 + $0x30] sm:$0xff]
    %v48 = vld [vmem:[%s2 + $0x38] sm:$0xff]
    %v49 = vld [vmem:[%s2 + $0x40] sm:$0xff]
    %v50 = vld [vmem:[%s2 + $0x48] sm:$0xff]
    %v51 = vld [vmem:[%s2 + $0x50] sm:$0xff]
    %v52 = vld [vmem:[%s2 + $0x58] sm:$0xff]
    %v53 = vld [vmem:[%s2 + $0x60] sm:$0xff]
    %v54 = vld [vmem:[%s2 + $0x68] sm:$0xff]
    %v55 = vld [vmem:[%s2 + $0x70] sm:$0xff]
    %v56 = vld [vmem:[%s2 + $0x78] sm:$0xff]
    %v57 = vmul.f32 %v25, %v41
    %v58 = vmul.f32 %v26, %v42
    %v59 = vmul.f32 %v27, %v43
    %v60 = vmul.f32 %v28, %v44
    %v61 = vmul.f32 %v29, %v45
    %v62 = vmul.f32 %v30, %v46
    %v63 = vmul.f32 %v31, %v47
    %v64 = vmul.f32 %v32, %v48
    %v65 = vmul.f32 %v33, %v49
    %v66 = vmul.f32 %v34, %v50
    %v67 = vmul.f32 %v35, %v51
    %v68 = vmul.f32 %v36, %v52
    %v69 = vmul.f32 %v37, %v53
    %v70 = vmul.f32 %v38, %v54
    %v71 = vmul.f32 %v39, %v55
    %v72 = vmul.f32 %v40, %v56
    %vm73 = vcmask 261120
    %v74 = vsel %vm73, %v57, 0.0
    %75 = vadd.xlane.f32.xlu0 %v74
    %v76 = vpop.xlane.xlu0 %75
    %v77 = vsel %vm73, %v58, 0.0
    %78 = vadd.xlane.f32.xlu0 %v77
    %v79 = vpop.xlane.xlu0 %78
    %v80 = vsel %vm73, %v59, 0.0
    %81 = vadd.xlane.f32.xlu0 %v80
    %v82 = vpop.xlane.xlu0 %81
    %v83 = vsel %vm73, %v60, 0.0
    %84 = vadd.xlane.f32.xlu0 %v83
    %v85 = vpop.xlane.xlu0 %84
    %v86 = vsel %vm73, %v61, 0.0
    %87 = vadd.xlane.f32.xlu0 %v86
    %v88 = vpop.xlane.xlu0 %87
    %v89 = vsel %vm73, %v62, 0.0
    %90 = vadd.xlane.f32.xlu0 %v89
    %v91 = vpop.xlane.xlu0 %90
    %v92 = vsel %vm73, %v63, 0.0
    %93 = vadd.xlane.f32.xlu0 %v92
    %v94 = vpop.xlane.xlu0 %93
    %v95 = vsel %vm73, %v64, 0.0
    %96 = vadd.xlane.f32.xlu0 %v95
    %v97 = vpop.xlane.xlu0 %96
    %v98 = vsel %vm73, %v65, 0.0
    %99 = vadd.xlane.f32.xlu0 %v98
    %v100 = vpop.xlane.xlu0 %99
    %v101 = vsel %vm73, %v66, 0.0
    %102 = vadd.xlane.f32.xlu0 %v101
    %v103 = vpop.xlane.xlu0 %102
    %v104 = vsel %vm73, %v67, 0.0
    %105 = vadd.xlane.f32.xlu0 %v104
    %v106 = vpop.xlane.xlu0 %105
    %v107 = vsel %vm73, %v68, 0.0
    %108 = vadd.xlane.f32.xlu0 %v107
    %v109 = vpop.xlane.xlu0 %108
    %v110 = vsel %vm73, %v69, 0.0
    %111 = vadd.xlane.f32.xlu0 %v110
    %v112 = vpop.xlane.xlu0 %111
    %v113 = vsel %vm73, %v70, 0.0
    %114 = vadd.xlane.f32.xlu0 %v113
    %v115 = vpop.xlane.xlu0 %114
    %v116 = vsel %vm73, %v71, 0.0
    %117 = vadd.xlane.f32.xlu0 %v116
    %v118 = vpop.xlane.xlu0 %117
    %v119 = vsel %vm73, %v72, 0.0
    %120 = vadd.xlane.f32.xlu0 %v119
    %v121 = vpop.xlane.xlu0 %120
    %v122 = vmul.f32 %v25, %v25
    %v123 = vmul.f32 %v26, %v26
    %v124 = vmul.f32 %v27, %v27
    %v125 = vmul.f32 %v28, %v28
    %v126 = vmul.f32 %v29, %v29
    %v127 = vmul.f32 %v30, %v30
    %v128 = vmul.f32 %v31, %v31
    %v129 = vmul.f32 %v32, %v32
    %v130 = vmul.f32 %v33, %v33
    %v131 = vmul.f32 %v34, %v34
    %v132 = vmul.f32 %v35, %v35
    %v133 = vmul.f32 %v36, %v36
    %v134 = vmul.f32 %v37, %v37
    %v135 = vmul.f32 %v38, %v38
    %v136 = vmul.f32 %v39, %v39
    %v137 = vmul.f32 %v40, %v40
    %v138 = vsel %vm73, %v122, 0.0
    %139 = vadd.xlane.f32.xlu0 %v138
    %v140 = vpop.xlane.xlu0 %139
    %v141 = vsel %vm73, %v123, 0.0
    %142 = vadd.xlane.f32.xlu0 %v141
    %v143 = vpop.xlane.xlu0 %142
    %v144 = vsel %vm73, %v124, 0.0
    %145 = vadd.xlane.f32.xlu0 %v144
    %v146 = vpop.xlane.xlu0 %145
    %v147 = vsel %vm73, %v125, 0.0
    %148 = vadd.xlane.f32.xlu0 %v147
    %v149 = vpop.xlane.xlu0 %148
    %v150 = vsel %vm73, %v126, 0.0
    %151 = vadd.xlane.f32.xlu0 %v150
    %v152 = vpop.xlane.xlu0 %151
    %v153 = vsel %vm73, %v127, 0.0
    %154 = vadd.xlane.f32.xlu0 %v153
    %v155 = vpop.xlane.xlu0 %154
    %v156 = vsel %vm73, %v128, 0.0
    %157 = vadd.xlane.f32.xlu0 %v156
    %v158 = vpop.xlane.xlu0 %157
    %v159 = vsel %vm73, %v129, 0.0
    %160 = vadd.xlane.f32.xlu0 %v159
    %v161 = vpop.xlane.xlu0 %160
    %v162 = vsel %vm73, %v130, 0.0
    %163 = vadd.xlane.f32.xlu0 %v162
    %v164 = vpop.xlane.xlu0 %163
    %v165 = vsel %vm73, %v131, 0.0
    %166 = vadd.xlane.f32.xlu0 %v165
    %v167 = vpop.xlane.xlu0 %166
    %v168 = vsel %vm73, %v132, 0.0
    %169 = vadd.xlane.f32.xlu0 %v168
    %v170 = vpop.xlane.xlu0 %169
    %v171 = vsel %vm73, %v133, 0.0
    %172 = vadd.xlane.f32.xlu0 %v171
    %v173 = vpop.xlane.xlu0 %172
    %v174 = vsel %vm73, %v134, 0.0
    %175 = vadd.xlane.f32.xlu0 %v174
    %v176 = vpop.xlane.xlu0 %175
    %v177 = vsel %vm73, %v135, 0.0
    %178 = vadd.xlane.f32.xlu0 %v177
    %v179 = vpop.xlane.xlu0 %178
    %v180 = vsel %vm73, %v136, 0.0
    %181 = vadd.xlane.f32.xlu0 %v180
    %v182 = vpop.xlane.xlu0 %181
    %v183 = vsel %vm73, %v137, 0.0
    %184 = vadd.xlane.f32.xlu0 %v183
    %v185 = vpop.xlane.xlu0 %184
    %v186 = vmul.f32 %v41, %v41
    %v187 = vmul.f32 %v42, %v42
    %v188 = vmul.f32 %v43, %v43
    %v189 = vmul.f32 %v44, %v44
    %v190 = vmul.f32 %v45, %v45
    %v191 = vmul.f32 %v46, %v46
    %v192 = vmul.f32 %v47, %v47
    %v193 = vmul.f32 %v48, %v48
    %v194 = vmul.f32 %v49, %v49
    %v195 = vmul.f32 %v50, %v50
    %v196 = vmul.f32 %v51, %v51
    %v197 = vmul.f32 %v52, %v52
    %v198 = vmul.f32 %v53, %v53
    %v199 = vmul.f32 %v54, %v54
    %v200 = vmul.f32 %v55, %v55
    %v201 = vmul.f32 %v56, %v56
    %v202 = vsel %vm73, %v186, 0.0
    %203 = vadd.xlane.f32.xlu0 %v202
    %v204 = vpop.xlane.xlu0 %203
    %v205 = vsel %vm73, %v187, 0.0
    %206 = vadd.xlane.f32.xlu0 %v205
    %v207 = vpop.xlane.xlu0 %206
    %v208 = vsel %vm73, %v188, 0.0
    %209 = vadd.xlane.f32.xlu0 %v208
    %v210 = vpop.xlane.xlu0 %209
    %v211 = vsel %vm73, %v189, 0.0
    %212 = vadd.xlane.f32.xlu0 %v211
    %v213 = vpop.xlane.xlu0 %212
    %v214 = vsel %vm73, %v190, 0.0
    %215 = vadd.xlane.f32.xlu0 %v214
    %v216 = vpop.xlane.xlu0 %215
    %v217 = vsel %vm73, %v191, 0.0
    %218 = vadd.xlane.f32.xlu0 %v217
    %v219 = vpop.xlane.xlu0 %218
    %v220 = vsel %vm73, %v192, 0.0
    %221 = vadd.xlane.f32.xlu0 %v220
    %v222 = vpop.xlane.xlu0 %221
    %v223 = vsel %vm73, %v193, 0.0
    %224 = vadd.xlane.f32.xlu0 %v223
    %v225 = vpop.xlane.xlu0 %224
    %v226 = vsel %vm73, %v194, 0.0
    %227 = vadd.xlane.f32.xlu0 %v226
    %v228 = vpop.xlane.xlu0 %227
    %v229 = vsel %vm73, %v195, 0.0
    %230 = vadd.xlane.f32.xlu0 %v229
    %v231 = vpop.xlane.xlu0 %230
    %v232 = vsel %vm73, %v196, 0.0
    %233 = vadd.xlane.f32.xlu0 %v232
    %v234 = vpop.xlane.xlu0 %233
    %v235 = vsel %vm73, %v197, 0.0
    %236 = vadd.xlane.f32.xlu0 %v235
    %v237 = vpop.xlane.xlu0 %236
    %v238 = vsel %vm73, %v198, 0.0
    %239 = vadd.xlane.f32.xlu0 %v238
    %v240 = vpop.xlane.xlu0 %239
    %v241 = vsel %vm73, %v199, 0.0
    %242 = vadd.xlane.f32.xlu0 %v241
    %v243 = vpop.xlane.xlu0 %242
    %v244 = vsel %vm73, %v200, 0.0
    %245 = vadd.xlane.f32.xlu0 %v244
    %v246 = vpop.xlane.xlu0 %245
    %v247 = vsel %vm73, %v201, 0.0
    %248 = vadd.xlane.f32.xlu0 %v247
    %v249 = vpop.xlane.xlu0 %248
    %v250 = vmax.f32 %v140, 1e-16
    %v251 = vmax.f32 %v143, 1e-16
    %v252 = vmax.f32 %v146, 1e-16
    %v253 = vmax.f32 %v149, 1e-16
    %v254 = vmax.f32 %v152, 1e-16
    %v255 = vmax.f32 %v155, 1e-16
    %v256 = vmax.f32 %v158, 1e-16
    %v257 = vmax.f32 %v161, 1e-16
    %v258 = vmax.f32 %v164, 1e-16
    %v259 = vmax.f32 %v167, 1e-16
    %v260 = vmax.f32 %v170, 1e-16
    %v261 = vmax.f32 %v173, 1e-16
    %v262 = vmax.f32 %v176, 1e-16
    %v263 = vmax.f32 %v179, 1e-16
    %v264 = vmax.f32 %v182, 1e-16
    %v265 = vmax.f32 %v185, 1e-16
    %v266 = vrsqrt.pop %v250
    %v267 = vrsqrt.pop %v251
    %v268 = vrsqrt.pop %v252
    %v269 = vrsqrt.pop %v253
    %v270 = vrsqrt.pop %v254
    %v271 = vrsqrt.pop %v255
    %v272 = vrsqrt.pop %v256
    %v273 = vrsqrt.pop %v257
    %v274 = vrsqrt.pop %v258
    %v275 = vrsqrt.pop %v259
    %v276 = vrsqrt.pop %v260
    %v277 = vrsqrt.pop %v261
    %v278 = vrsqrt.pop %v262
    %v279 = vrsqrt.pop %v263
    %v280 = vrsqrt.pop %v264
    %v281 = vrsqrt.pop %v265
    %v282 = vmax.f32 %v204, 1e-16
    %v283 = vmax.f32 %v207, 1e-16
    %v284 = vmax.f32 %v210, 1e-16
    %v285 = vmax.f32 %v213, 1e-16
    %v286 = vmax.f32 %v216, 1e-16
    %v287 = vmax.f32 %v219, 1e-16
    %v288 = vmax.f32 %v222, 1e-16
    %v289 = vmax.f32 %v225, 1e-16
    %v290 = vmax.f32 %v228, 1e-16
    %v291 = vmax.f32 %v231, 1e-16
    %v292 = vmax.f32 %v234, 1e-16
    %v293 = vmax.f32 %v237, 1e-16
    %v294 = vmax.f32 %v240, 1e-16
    %v295 = vmax.f32 %v243, 1e-16
    %v296 = vmax.f32 %v246, 1e-16
    %v297 = vmax.f32 %v249, 1e-16
    %v298 = vrsqrt.pop %v282
    %v299 = vrsqrt.pop %v283
    %v300 = vrsqrt.pop %v284
    %v301 = vrsqrt.pop %v285
    %v302 = vrsqrt.pop %v286
    %v303 = vrsqrt.pop %v287
    %v304 = vrsqrt.pop %v288
    %v305 = vrsqrt.pop %v289
    %v306 = vrsqrt.pop %v290
    %v307 = vrsqrt.pop %v291
    %v308 = vrsqrt.pop %v292
    %v309 = vrsqrt.pop %v293
    %v310 = vrsqrt.pop %v294
    %v311 = vrsqrt.pop %v295
    %v312 = vrsqrt.pop %v296
    %v313 = vrsqrt.pop %v297
    %v314 = vmul.f32 %v76, %v266
    %v315 = vmul.f32 %v79, %v267
    %v316 = vmul.f32 %v82, %v268
    %v317 = vmul.f32 %v85, %v269
    %v318 = vmul.f32 %v88, %v270
    %v319 = vmul.f32 %v91, %v271
    %v320 = vmul.f32 %v94, %v272
    %v321 = vmul.f32 %v97, %v273
    %v322 = vmul.f32 %v100, %v274
    %v323 = vmul.f32 %v103, %v275
    %v324 = vmul.f32 %v106, %v276
    %v325 = vmul.f32 %v109, %v277
    %v326 = vmul.f32 %v112, %v278
    %v327 = vmul.f32 %v115, %v279
    %v328 = vmul.f32 %v118, %v280
    %v329 = vmul.f32 %v121, %v281
    %v330 = vmul.f32 %v314, %v298
    %v331 = vmul.f32 %v315, %v299
    %v332 = vmul.f32 %v316, %v300
    %v333 = vmul.f32 %v317, %v301
    %v334 = vmul.f32 %v318, %v302
    %v335 = vmul.f32 %v319, %v303
    %v336 = vmul.f32 %v320, %v304
    %v337 = vmul.f32 %v321, %v305
    %v338 = vmul.f32 %v322, %v306
    %v339 = vmul.f32 %v323, %v307
    %v340 = vmul.f32 %v324, %v308
    %v341 = vmul.f32 %v325, %v309
    %v342 = vmul.f32 %v326, %v310
    %v343 = vmul.f32 %v327, %v311
    %v344 = vmul.f32 %v328, %v312
    %v345 = vmul.f32 %v329, %v313
    %v346 = vsub.f32 1.0, %v330
    %v347 = vsub.f32 1.0, %v331
    %v348 = vsub.f32 1.0, %v332
    %v349 = vsub.f32 1.0, %v333
    %v350 = vsub.f32 1.0, %v334
    %v351 = vsub.f32 1.0, %v335
    %v352 = vsub.f32 1.0, %v336
    %v353 = vsub.f32 1.0, %v337
    %v354 = vsub.f32 1.0, %v338
    %v355 = vsub.f32 1.0, %v339
    %v356 = vsub.f32 1.0, %v340
    %v357 = vsub.f32 1.0, %v341
    %v358 = vsub.f32 1.0, %v342
    %v359 = vsub.f32 1.0, %v343
    %v360 = vsub.f32 1.0, %v344
    %v361 = vsub.f32 1.0, %v345
    %v362 = vld [vmem:[%s0] sm:$0x1]
    %vm363 = vcmp.eq.s32.totalorder %v362, 1
    %vm364 = vcmp.eq.s32.totalorder %v362, 0
    %vm365 = vmor %vm363, %vm364
    %v382 = vlaneseq
    %v383 = vshrl.u32 %v382, 7
    %v384 = vsub.s32 0, %v383
    %v385 = vrot.slane %v346, %v384
    %v386 = vlaneseq
    %v387 = vshrl.u32 %v386, 7
    %v388 = vsub.s32 1, %v387
    %v389 = vrot.slane %v346, %v388
    %v390 = vlaneseq
    %v391 = vshrl.u32 %v390, 7
    %v392 = vsub.s32 2, %v391
    %v393 = vrot.slane %v346, %v392
    %v394 = vlaneseq
    %v395 = vshrl.u32 %v394, 7
    %v396 = vsub.s32 3, %v395
    %v397 = vrot.slane %v346, %v396
    %v398 = vlaneseq
    %v399 = vshrl.u32 %v398, 7
    %v400 = vsub.s32 4, %v399
    %v401 = vrot.slane %v346, %v400
    %v402 = vlaneseq
    %v403 = vshrl.u32 %v402, 7
    %v404 = vsub.s32 5, %v403
    %v405 = vrot.slane %v346, %v404
    %v406 = vlaneseq
    %v407 = vshrl.u32 %v406, 7
    %v408 = vsub.s32 6, %v407
    %v409 = vrot.slane %v346, %v408
    %v410 = vlaneseq
    %v411 = vshrl.u32 %v410, 7
    %v412 = vsub.s32 7, %v411
    %v413 = vrot.slane %v346, %v412
    %v414 = vlaneseq
    %v415 = vshrl.u32 %v414, 7
    %v416 = vsub.s32 0, %v415
    %v417 = vrot.slane %v347, %v416
    %v418 = vlaneseq
    %v419 = vshrl.u32 %v418, 7
    %v420 = vsub.s32 1, %v419
    %v421 = vrot.slane %v347, %v420
    %v422 = vlaneseq
    %v423 = vshrl.u32 %v422, 7
    %v424 = vsub.s32 2, %v423
    %v425 = vrot.slane %v347, %v424
    %v426 = vlaneseq
    %v427 = vshrl.u32 %v426, 7
    %v428 = vsub.s32 3, %v427
    %v429 = vrot.slane %v347, %v428
    %v430 = vlaneseq
    %v431 = vshrl.u32 %v430, 7
    %v432 = vsub.s32 4, %v431
    %v433 = vrot.slane %v347, %v432
    %v434 = vlaneseq
    %v435 = vshrl.u32 %v434, 7
    %v436 = vsub.s32 5, %v435
    %v437 = vrot.slane %v347, %v436
    %v438 = vlaneseq
    %v439 = vshrl.u32 %v438, 7
    %v440 = vsub.s32 6, %v439
    %v441 = vrot.slane %v347, %v440
    %v442 = vlaneseq
    %v443 = vshrl.u32 %v442, 7
    %v444 = vsub.s32 7, %v443
    %v445 = vrot.slane %v347, %v444
    %v446 = vlaneseq
    %v447 = vshrl.u32 %v446, 7
    %v448 = vsub.s32 0, %v447
    %v449 = vrot.slane %v348, %v448
    %v450 = vlaneseq
    %v451 = vshrl.u32 %v450, 7
    %v452 = vsub.s32 1, %v451
    %v453 = vrot.slane %v348, %v452
    %v454 = vlaneseq
    %v455 = vshrl.u32 %v454, 7
    %v456 = vsub.s32 2, %v455
    %v457 = vrot.slane %v348, %v456
    %v458 = vlaneseq
    %v459 = vshrl.u32 %v458, 7
    %v460 = vsub.s32 3, %v459
    %v461 = vrot.slane %v348, %v460
    %v462 = vlaneseq
    %v463 = vshrl.u32 %v462, 7
    %v464 = vsub.s32 4, %v463
    %v465 = vrot.slane %v348, %v464
    %v466 = vlaneseq
    %v467 = vshrl.u32 %v466, 7
    %v468 = vsub.s32 5, %v467
    %v469 = vrot.slane %v348, %v468
    %v470 = vlaneseq
    %v471 = vshrl.u32 %v470, 7
    %v472 = vsub.s32 6, %v471
    %v473 = vrot.slane %v348, %v472
    %v474 = vlaneseq
    %v475 = vshrl.u32 %v474, 7
    %v476 = vsub.s32 7, %v475
    %v477 = vrot.slane %v348, %v476
    %v478 = vlaneseq
    %v479 = vshrl.u32 %v478, 7
    %v480 = vsub.s32 0, %v479
    %v481 = vrot.slane %v349, %v480
    %v482 = vlaneseq
    %v483 = vshrl.u32 %v482, 7
    %v484 = vsub.s32 1, %v483
    %v485 = vrot.slane %v349, %v484
    %v486 = vlaneseq
    %v487 = vshrl.u32 %v486, 7
    %v488 = vsub.s32 2, %v487
    %v489 = vrot.slane %v349, %v488
    %v490 = vlaneseq
    %v491 = vshrl.u32 %v490, 7
    %v492 = vsub.s32 3, %v491
    %v493 = vrot.slane %v349, %v492
    %v494 = vlaneseq
    %v495 = vshrl.u32 %v494, 7
    %v496 = vsub.s32 4, %v495
    %v497 = vrot.slane %v349, %v496
    %v498 = vlaneseq
    %v499 = vshrl.u32 %v498, 7
    %v500 = vsub.s32 5, %v499
    %v501 = vrot.slane %v349, %v500
    %v502 = vlaneseq
    %v503 = vshrl.u32 %v502, 7
    %v504 = vsub.s32 6, %v503
    %v505 = vrot.slane %v349, %v504
    %v506 = vlaneseq
    %v507 = vshrl.u32 %v506, 7
    %v508 = vsub.s32 7, %v507
    %v509 = vrot.slane %v349, %v508
    %v510 = vlaneseq
    %v511 = vshrl.u32 %v510, 7
    %v512 = vsub.s32 0, %v511
    %v513 = vrot.slane %v350, %v512
    %v514 = vlaneseq
    %v515 = vshrl.u32 %v514, 7
    %v516 = vsub.s32 1, %v515
    %v517 = vrot.slane %v350, %v516
    %v518 = vlaneseq
    %v519 = vshrl.u32 %v518, 7
    %v520 = vsub.s32 2, %v519
    %v521 = vrot.slane %v350, %v520
    %v522 = vlaneseq
    %v523 = vshrl.u32 %v522, 7
    %v524 = vsub.s32 3, %v523
    %v525 = vrot.slane %v350, %v524
    %v526 = vlaneseq
    %v527 = vshrl.u32 %v526, 7
    %v528 = vsub.s32 4, %v527
    %v529 = vrot.slane %v350, %v528
    %v530 = vlaneseq
    %v531 = vshrl.u32 %v530, 7
    %v532 = vsub.s32 5, %v531
    %v533 = vrot.slane %v350, %v532
    %v534 = vlaneseq
    %v535 = vshrl.u32 %v534, 7
    %v536 = vsub.s32 6, %v535
    %v537 = vrot.slane %v350, %v536
    %v538 = vlaneseq
    %v539 = vshrl.u32 %v538, 7
    %v540 = vsub.s32 7, %v539
    %v541 = vrot.slane %v350, %v540
    %v542 = vlaneseq
    %v543 = vshrl.u32 %v542, 7
    %v544 = vsub.s32 0, %v543
    %v545 = vrot.slane %v351, %v544
    %v546 = vlaneseq
    %v547 = vshrl.u32 %v546, 7
    %v548 = vsub.s32 1, %v547
    %v549 = vrot.slane %v351, %v548
    %v550 = vlaneseq
    %v551 = vshrl.u32 %v550, 7
    %v552 = vsub.s32 2, %v551
    %v553 = vrot.slane %v351, %v552
    %v554 = vlaneseq
    %v555 = vshrl.u32 %v554, 7
    %v556 = vsub.s32 3, %v555
    %v557 = vrot.slane %v351, %v556
    %v558 = vlaneseq
    %v559 = vshrl.u32 %v558, 7
    %v560 = vsub.s32 4, %v559
    %v561 = vrot.slane %v351, %v560
    %v562 = vlaneseq
    %v563 = vshrl.u32 %v562, 7
    %v564 = vsub.s32 5, %v563
    %v565 = vrot.slane %v351, %v564
    %v566 = vlaneseq
    %v567 = vshrl.u32 %v566, 7
    %v568 = vsub.s32 6, %v567
    %v569 = vrot.slane %v351, %v568
    %v570 = vlaneseq
    %v571 = vshrl.u32 %v570, 7
    %v572 = vsub.s32 7, %v571
    %v573 = vrot.slane %v351, %v572
    %v574 = vlaneseq
    %v575 = vshrl.u32 %v574, 7
    %v576 = vsub.s32 0, %v575
    %v577 = vrot.slane %v352, %v576
    %v578 = vlaneseq
    %v579 = vshrl.u32 %v578, 7
    %v580 = vsub.s32 1, %v579
    %v581 = vrot.slane %v352, %v580
    %v582 = vlaneseq
    %v583 = vshrl.u32 %v582, 7
    %v584 = vsub.s32 2, %v583
    %v585 = vrot.slane %v352, %v584
    %v586 = vlaneseq
    %v587 = vshrl.u32 %v586, 7
    %v588 = vsub.s32 3, %v587
    %v589 = vrot.slane %v352, %v588
    %v590 = vlaneseq
    %v591 = vshrl.u32 %v590, 7
    %v592 = vsub.s32 4, %v591
    %v593 = vrot.slane %v352, %v592
    %v594 = vlaneseq
    %v595 = vshrl.u32 %v594, 7
    %v596 = vsub.s32 5, %v595
    %v597 = vrot.slane %v352, %v596
    %v598 = vlaneseq
    %v599 = vshrl.u32 %v598, 7
    %v600 = vsub.s32 6, %v599
    %v601 = vrot.slane %v352, %v600
    %v602 = vlaneseq
    %v603 = vshrl.u32 %v602, 7
    %v604 = vsub.s32 7, %v603
    %v605 = vrot.slane %v352, %v604
    %v606 = vlaneseq
    %v607 = vshrl.u32 %v606, 7
    %v608 = vsub.s32 0, %v607
    %v609 = vrot.slane %v353, %v608
    %v610 = vlaneseq
    %v611 = vshrl.u32 %v610, 7
    %v612 = vsub.s32 1, %v611
    %v613 = vrot.slane %v353, %v612
    %v614 = vlaneseq
    %v615 = vshrl.u32 %v614, 7
    %v616 = vsub.s32 2, %v615
    %v617 = vrot.slane %v353, %v616
    %v618 = vlaneseq
    %v619 = vshrl.u32 %v618, 7
    %v620 = vsub.s32 3, %v619
    %v621 = vrot.slane %v353, %v620
    %v622 = vlaneseq
    %v623 = vshrl.u32 %v622, 7
    %v624 = vsub.s32 4, %v623
    %v625 = vrot.slane %v353, %v624
    %v626 = vlaneseq
    %v627 = vshrl.u32 %v626, 7
    %v628 = vsub.s32 5, %v627
    %v629 = vrot.slane %v353, %v628
    %v630 = vlaneseq
    %v631 = vshrl.u32 %v630, 7
    %v632 = vsub.s32 6, %v631
    %v633 = vrot.slane %v353, %v632
    %v634 = vlaneseq
    %v635 = vshrl.u32 %v634, 7
    %v636 = vsub.s32 7, %v635
    %v637 = vrot.slane %v353, %v636
    %v638 = vlaneseq
    %v639 = vshrl.u32 %v638, 7
    %v640 = vsub.s32 0, %v639
    %v641 = vrot.slane %v354, %v640
    %v642 = vlaneseq
    %v643 = vshrl.u32 %v642, 7
    %v644 = vsub.s32 1, %v643
    %v645 = vrot.slane %v354, %v644
    %v646 = vlaneseq
    %v647 = vshrl.u32 %v646, 7
    %v648 = vsub.s32 2, %v647
    %v649 = vrot.slane %v354, %v648
    %v650 = vlaneseq
    %v651 = vshrl.u32 %v650, 7
    %v652 = vsub.s32 3, %v651
    %v653 = vrot.slane %v354, %v652
    %v654 = vlaneseq
    %v655 = vshrl.u32 %v654, 7
    %v656 = vsub.s32 4, %v655
    %v657 = vrot.slane %v354, %v656
    %v658 = vlaneseq
    %v659 = vshrl.u32 %v658, 7
    %v660 = vsub.s32 5, %v659
    %v661 = vrot.slane %v354, %v660
    %v662 = vlaneseq
    %v663 = vshrl.u32 %v662, 7
    %v664 = vsub.s32 6, %v663
    %v665 = vrot.slane %v354, %v664
    %v666 = vlaneseq
    %v667 = vshrl.u32 %v666, 7
    %v668 = vsub.s32 7, %v667
    %v669 = vrot.slane %v354, %v668
    %v670 = vlaneseq
    %v671 = vshrl.u32 %v670, 7
    %v672 = vsub.s32 0, %v671
    %v673 = vrot.slane %v355, %v672
    %v674 = vlaneseq
    %v675 = vshrl.u32 %v674, 7
    %v676 = vsub.s32 1, %v675
    %v677 = vrot.slane %v355, %v676
    %v678 = vlaneseq
    %v679 = vshrl.u32 %v678, 7
    %v680 = vsub.s32 2, %v679
    %v681 = vrot.slane %v355, %v680
    %v682 = vlaneseq
    %v683 = vshrl.u32 %v682, 7
    %v684 = vsub.s32 3, %v683
    %v685 = vrot.slane %v355, %v684
    %v686 = vlaneseq
    %v687 = vshrl.u32 %v686, 7
    %v688 = vsub.s32 4, %v687
    %v689 = vrot.slane %v355, %v688
    %v690 = vlaneseq
    %v691 = vshrl.u32 %v690, 7
    %v692 = vsub.s32 5, %v691
    %v693 = vrot.slane %v355, %v692
    %v694 = vlaneseq
    %v695 = vshrl.u32 %v694, 7
    %v696 = vsub.s32 6, %v695
    %v697 = vrot.slane %v355, %v696
    %v698 = vlaneseq
    %v699 = vshrl.u32 %v698, 7
    %v700 = vsub.s32 7, %v699
    %v701 = vrot.slane %v355, %v700
    %v702 = vlaneseq
    %v703 = vshrl.u32 %v702, 7
    %v704 = vsub.s32 0, %v703
    %v705 = vrot.slane %v356, %v704
    %v706 = vlaneseq
    %v707 = vshrl.u32 %v706, 7
    %v708 = vsub.s32 1, %v707
    %v709 = vrot.slane %v356, %v708
    %v710 = vlaneseq
    %v711 = vshrl.u32 %v710, 7
    %v712 = vsub.s32 2, %v711
    %v713 = vrot.slane %v356, %v712
    %v714 = vlaneseq
    %v715 = vshrl.u32 %v714, 7
    %v716 = vsub.s32 3, %v715
    %v717 = vrot.slane %v356, %v716
    %v718 = vlaneseq
    %v719 = vshrl.u32 %v718, 7
    %v720 = vsub.s32 4, %v719
    %v721 = vrot.slane %v356, %v720
    %v722 = vlaneseq
    %v723 = vshrl.u32 %v722, 7
    %v724 = vsub.s32 5, %v723
    %v725 = vrot.slane %v356, %v724
    %v726 = vlaneseq
    %v727 = vshrl.u32 %v726, 7
    %v728 = vsub.s32 6, %v727
    %v729 = vrot.slane %v356, %v728
    %v730 = vlaneseq
    %v731 = vshrl.u32 %v730, 7
    %v732 = vsub.s32 7, %v731
    %v733 = vrot.slane %v356, %v732
    %v734 = vlaneseq
    %v735 = vshrl.u32 %v734, 7
    %v736 = vsub.s32 0, %v735
    %v737 = vrot.slane %v357, %v736
    %v738 = vlaneseq
    %v739 = vshrl.u32 %v738, 7
    %v740 = vsub.s32 1, %v739
    %v741 = vrot.slane %v357, %v740
    %v742 = vlaneseq
    %v743 = vshrl.u32 %v742, 7
    %v744 = vsub.s32 2, %v743
    %v745 = vrot.slane %v357, %v744
    %v746 = vlaneseq
    %v747 = vshrl.u32 %v746, 7
    %v748 = vsub.s32 3, %v747
    %v749 = vrot.slane %v357, %v748
    %v750 = vlaneseq
    %v751 = vshrl.u32 %v750, 7
    %v752 = vsub.s32 4, %v751
    %v753 = vrot.slane %v357, %v752
    %v754 = vlaneseq
    %v755 = vshrl.u32 %v754, 7
    %v756 = vsub.s32 5, %v755
    %v757 = vrot.slane %v357, %v756
    %v758 = vlaneseq
    %v759 = vshrl.u32 %v758, 7
    %v760 = vsub.s32 6, %v759
    %v761 = vrot.slane %v357, %v760
    %v762 = vlaneseq
    %v763 = vshrl.u32 %v762, 7
    %v764 = vsub.s32 7, %v763
    %v765 = vrot.slane %v357, %v764
    %v766 = vlaneseq
    %v767 = vshrl.u32 %v766, 7
    %v768 = vsub.s32 0, %v767
    %v769 = vrot.slane %v358, %v768
    %v770 = vlaneseq
    %v771 = vshrl.u32 %v770, 7
    %v772 = vsub.s32 1, %v771
    %v773 = vrot.slane %v358, %v772
    %v774 = vlaneseq
    %v775 = vshrl.u32 %v774, 7
    %v776 = vsub.s32 2, %v775
    %v777 = vrot.slane %v358, %v776
    %v778 = vlaneseq
    %v779 = vshrl.u32 %v778, 7
    %v780 = vsub.s32 3, %v779
    %v781 = vrot.slane %v358, %v780
    %v782 = vlaneseq
    %v783 = vshrl.u32 %v782, 7
    %v784 = vsub.s32 4, %v783
    %v785 = vrot.slane %v358, %v784
    %v786 = vlaneseq
    %v787 = vshrl.u32 %v786, 7
    %v788 = vsub.s32 5, %v787
    %v789 = vrot.slane %v358, %v788
    %v790 = vlaneseq
    %v791 = vshrl.u32 %v790, 7
    %v792 = vsub.s32 6, %v791
    %v793 = vrot.slane %v358, %v792
    %v794 = vlaneseq
    %v795 = vshrl.u32 %v794, 7
    %v796 = vsub.s32 7, %v795
    %v797 = vrot.slane %v358, %v796
    %v798 = vlaneseq
    %v799 = vshrl.u32 %v798, 7
    %v800 = vsub.s32 0, %v799
    %v801 = vrot.slane %v359, %v800
    %v802 = vlaneseq
    %v803 = vshrl.u32 %v802, 7
    %v804 = vsub.s32 1, %v803
    %v805 = vrot.slane %v359, %v804
    %v806 = vlaneseq
    %v807 = vshrl.u32 %v806, 7
    %v808 = vsub.s32 2, %v807
    %v809 = vrot.slane %v359, %v808
    %v810 = vlaneseq
    %v811 = vshrl.u32 %v810, 7
    %v812 = vsub.s32 3, %v811
    %v813 = vrot.slane %v359, %v812
    %v814 = vlaneseq
    %v815 = vshrl.u32 %v814, 7
    %v816 = vsub.s32 4, %v815
    %v817 = vrot.slane %v359, %v816
    %v818 = vlaneseq
    %v819 = vshrl.u32 %v818, 7
    %v820 = vsub.s32 5, %v819
    %v821 = vrot.slane %v359, %v820
    %v822 = vlaneseq
    %v823 = vshrl.u32 %v822, 7
    %v824 = vsub.s32 6, %v823
    %v825 = vrot.slane %v359, %v824
    %v826 = vlaneseq
    %v827 = vshrl.u32 %v826, 7
    %v828 = vsub.s32 7, %v827
    %v829 = vrot.slane %v359, %v828
    %v830 = vlaneseq
    %v831 = vshrl.u32 %v830, 7
    %v832 = vsub.s32 0, %v831
    %v833 = vrot.slane %v360, %v832
    %v834 = vlaneseq
    %v835 = vshrl.u32 %v834, 7
    %v836 = vsub.s32 1, %v835
    %v837 = vrot.slane %v360, %v836
    %v838 = vlaneseq
    %v839 = vshrl.u32 %v838, 7
    %v840 = vsub.s32 2, %v839
    %v841 = vrot.slane %v360, %v840
    %v842 = vlaneseq
    %v843 = vshrl.u32 %v842, 7
    %v844 = vsub.s32 3, %v843
    %v845 = vrot.slane %v360, %v844
    %v846 = vlaneseq
    %v847 = vshrl.u32 %v846, 7
    %v848 = vsub.s32 4, %v847
    %v849 = vrot.slane %v360, %v848
    %v850 = vlaneseq
    %v851 = vshrl.u32 %v850, 7
    %v852 = vsub.s32 5, %v851
    %v853 = vrot.slane %v360, %v852
    %v854 = vlaneseq
    %v855 = vshrl.u32 %v854, 7
    %v856 = vsub.s32 6, %v855
    %v857 = vrot.slane %v360, %v856
    %v858 = vlaneseq
    %v859 = vshrl.u32 %v858, 7
    %v860 = vsub.s32 7, %v859
    %v861 = vrot.slane %v360, %v860
    %v862 = vlaneseq
    %v863 = vshrl.u32 %v862, 7
    %v864 = vsub.s32 0, %v863
    %v865 = vrot.slane %v361, %v864
    %v866 = vlaneseq
    %v867 = vshrl.u32 %v866, 7
    %v868 = vsub.s32 1, %v867
    %v869 = vrot.slane %v361, %v868
    %v870 = vlaneseq
    %v871 = vshrl.u32 %v870, 7
    %v872 = vsub.s32 2, %v871
    %v873 = vrot.slane %v361, %v872
    %v874 = vlaneseq
    %v875 = vshrl.u32 %v874, 7
    %v876 = vsub.s32 3, %v875
    %v877 = vrot.slane %v361, %v876
    %v878 = vlaneseq
    %v879 = vshrl.u32 %v878, 7
    %v880 = vsub.s32 4, %v879
    %v881 = vrot.slane %v361, %v880
    %v882 = vlaneseq
    %v883 = vshrl.u32 %v882, 7
    %v884 = vsub.s32 5, %v883
    %v885 = vrot.slane %v361, %v884
    %v886 = vlaneseq
    %v887 = vshrl.u32 %v886, 7
    %v888 = vsub.s32 6, %v887
    %v889 = vrot.slane %v361, %v888
    %v890 = vlaneseq
    %v891 = vshrl.u32 %v890, 7
    %v892 = vsub.s32 7, %v891
    %v893 = vrot.slane %v361, %v892
    %v894 = vcombine.low %v385, %v389
    %v895 = vcombine.low %v393, %v397
    %v896 = vcombine.low %v401, %v405
    %v897 = vcombine.low %v409, %v413
    %v899 = vunpack.c.l.s4 1966171168
    %v900 = vunpack.c.0.s8 %v899
    %v901 = vlaneseq
    %v902 = vshrl.u32 %v901, 7
    %v903 = vsub.s32 %v900, %v902
    %v904 = vrot.slane %v894, %v903
    %v906 = vunpack.c.l.s4 1966171168
    %v907 = vunpack.c.0.s8 %v906
    %v908 = vlaneseq
    %v909 = vshrl.u32 %v908, 7
    %v910 = vsub.s32 %v907, %v909
    %v911 = vrot.slane %v895, %v910
    %v913 = vunpack.c.l.s4 1966171168
    %v914 = vunpack.c.0.s8 %v913
    %v915 = vlaneseq
    %v916 = vshrl.u32 %v915, 7
    %v917 = vsub.s32 %v914, %v916
    %v918 = vrot.slane %v896, %v917
    %v920 = vunpack.c.l.s4 1966171168
    %v921 = vunpack.c.0.s8 %v920
    %v922 = vlaneseq
    %v923 = vshrl.u32 %v922, 7
    %v924 = vsub.s32 %v921, %v923
    %v925 = vrot.slane %v897, %v924
    %v926 = vcombine.low %v904, %v911
    %v927 = vcombine.low %v918, %v925
    %v929 = vunpack.c.l.s4 1966171168
    %v930 = vunpack.c.0.s8 %v929
    %v931 = vlaneseq
    %v932 = vshrl.u32 %v931, 7
    %v933 = vsub.s32 %v930, %v932
    %v934 = vrot.slane %v926, %v933
    %v936 = vunpack.c.l.s4 1966171168
    %v937 = vunpack.c.0.s8 %v936
    %v938 = vlaneseq
    %v939 = vshrl.u32 %v938, 7
    %v940 = vsub.s32 %v937, %v939
    %v941 = vrot.slane %v927, %v940
    %v942 = vcombine.low %v934, %v941
    %v943 = vcombine.low %v417, %v421
    %v944 = vcombine.low %v425, %v429
    %v945 = vcombine.low %v433, %v437
    %v946 = vcombine.low %v441, %v445
    %v948 = vunpack.c.l.s4 1966171168
    %v949 = vunpack.c.0.s8 %v948
    %v950 = vlaneseq
    %v951 = vshrl.u32 %v950, 7
    %v952 = vsub.s32 %v949, %v951
    %v953 = vrot.slane %v943, %v952
    %v955 = vunpack.c.l.s4 1966171168
    %v956 = vunpack.c.0.s8 %v955
    %v957 = vlaneseq
    %v958 = vshrl.u32 %v957, 7
    %v959 = vsub.s32 %v956, %v958
    %v960 = vrot.slane %v944, %v959
    %v962 = vunpack.c.l.s4 1966171168
    %v963 = vunpack.c.0.s8 %v962
    %v964 = vlaneseq
    %v965 = vshrl.u32 %v964, 7
    %v966 = vsub.s32 %v963, %v965
    %v967 = vrot.slane %v945, %v966
    %v969 = vunpack.c.l.s4 1966171168
    %v970 = vunpack.c.0.s8 %v969
    %v971 = vlaneseq
    %v972 = vshrl.u32 %v971, 7
    %v973 = vsub.s32 %v970, %v972
    %v974 = vrot.slane %v946, %v973
    %v975 = vcombine.low %v953, %v960
    %v976 = vcombine.low %v967, %v974
    %v978 = vunpack.c.l.s4 1966171168
    %v979 = vunpack.c.0.s8 %v978
    %v980 = vlaneseq
    %v981 = vshrl.u32 %v980, 7
    %v982 = vsub.s32 %v979, %v981
    %v983 = vrot.slane %v975, %v982
    %v985 = vunpack.c.l.s4 1966171168
    %v986 = vunpack.c.0.s8 %v985
    %v987 = vlaneseq
    %v988 = vshrl.u32 %v987, 7
    %v989 = vsub.s32 %v986, %v988
    %v990 = vrot.slane %v976, %v989
    %v991 = vcombine.low %v983, %v990
    %v992 = vcombine.low %v449, %v453
    %v993 = vcombine.low %v457, %v461
    %v994 = vcombine.low %v465, %v469
    %v995 = vcombine.low %v473, %v477
    %v997 = vunpack.c.l.s4 1966171168
    %v998 = vunpack.c.0.s8 %v997
    %v999 = vlaneseq
    %v1000 = vshrl.u32 %v999, 7
    %v1001 = vsub.s32 %v998, %v1000
    %v1002 = vrot.slane %v992, %v1001
    %v1004 = vunpack.c.l.s4 1966171168
    %v1005 = vunpack.c.0.s8 %v1004
    %v1006 = vlaneseq
    %v1007 = vshrl.u32 %v1006, 7
    %v1008 = vsub.s32 %v1005, %v1007
    %v1009 = vrot.slane %v993, %v1008
    %v1011 = vunpack.c.l.s4 1966171168
    %v1012 = vunpack.c.0.s8 %v1011
    %v1013 = vlaneseq
    %v1014 = vshrl.u32 %v1013, 7
    %v1015 = vsub.s32 %v1012, %v1014
    %v1016 = vrot.slane %v994, %v1015
    %v1018 = vunpack.c.l.s4 1966171168
    %v1019 = vunpack.c.0.s8 %v1018
    %v1020 = vlaneseq
    %v1021 = vshrl.u32 %v1020, 7
    %v1022 = vsub.s32 %v1019, %v1021
    %v1023 = vrot.slane %v995, %v1022
    %v1024 = vcombine.low %v1002, %v1009
    %v1025 = vcombine.low %v1016, %v1023
    %v1027 = vunpack.c.l.s4 1966171168
    %v1028 = vunpack.c.0.s8 %v1027
    %v1029 = vlaneseq
    %v1030 = vshrl.u32 %v1029, 7
    %v1031 = vsub.s32 %v1028, %v1030
    %v1032 = vrot.slane %v1024, %v1031
    %v1034 = vunpack.c.l.s4 1966171168
    %v1035 = vunpack.c.0.s8 %v1034
    %v1036 = vlaneseq
    %v1037 = vshrl.u32 %v1036, 7
    %v1038 = vsub.s32 %v1035, %v1037
    %v1039 = vrot.slane %v1025, %v1038
    %v1040 = vcombine.low %v1032, %v1039
    %v1041 = vcombine.low %v481, %v485
    %v1042 = vcombine.low %v489, %v493
    %v1043 = vcombine.low %v497, %v501
    %v1044 = vcombine.low %v505, %v509
    %v1046 = vunpack.c.l.s4 1966171168
    %v1047 = vunpack.c.0.s8 %v1046
    %v1048 = vlaneseq
    %v1049 = vshrl.u32 %v1048, 7
    %v1050 = vsub.s32 %v1047, %v1049
    %v1051 = vrot.slane %v1041, %v1050
    %v1053 = vunpack.c.l.s4 1966171168
    %v1054 = vunpack.c.0.s8 %v1053
    %v1055 = vlaneseq
    %v1056 = vshrl.u32 %v1055, 7
    %v1057 = vsub.s32 %v1054, %v1056
    %v1058 = vrot.slane %v1042, %v1057
    %v1060 = vunpack.c.l.s4 1966171168
    %v1061 = vunpack.c.0.s8 %v1060
    %v1062 = vlaneseq
    %v1063 = vshrl.u32 %v1062, 7
    %v1064 = vsub.s32 %v1061, %v1063
    %v1065 = vrot.slane %v1043, %v1064
    %v1067 = vunpack.c.l.s4 1966171168
    %v1068 = vunpack.c.0.s8 %v1067
    %v1069 = vlaneseq
    %v1070 = vshrl.u32 %v1069, 7
    %v1071 = vsub.s32 %v1068, %v1070
    %v1072 = vrot.slane %v1044, %v1071
    %v1073 = vcombine.low %v1051, %v1058
    %v1074 = vcombine.low %v1065, %v1072
    %v1076 = vunpack.c.l.s4 1966171168
    %v1077 = vunpack.c.0.s8 %v1076
    %v1078 = vlaneseq
    %v1079 = vshrl.u32 %v1078, 7
    %v1080 = vsub.s32 %v1077, %v1079
    %v1081 = vrot.slane %v1073, %v1080
    %v1083 = vunpack.c.l.s4 1966171168
    %v1084 = vunpack.c.0.s8 %v1083
    %v1085 = vlaneseq
    %v1086 = vshrl.u32 %v1085, 7
    %v1087 = vsub.s32 %v1084, %v1086
    %v1088 = vrot.slane %v1074, %v1087
    %v1089 = vcombine.low %v1081, %v1088
    %v1090 = vcombine.low %v513, %v517
    %v1091 = vcombine.low %v521, %v525
    %v1092 = vcombine.low %v529, %v533
    %v1093 = vcombine.low %v537, %v541
    %v1095 = vunpack.c.l.s4 1966171168
    %v1096 = vunpack.c.0.s8 %v1095
    %v1097 = vlaneseq
    %v1098 = vshrl.u32 %v1097, 7
    %v1099 = vsub.s32 %v1096, %v1098
    %v1100 = vrot.slane %v1090, %v1099
    %v1102 = vunpack.c.l.s4 1966171168
    %v1103 = vunpack.c.0.s8 %v1102
    %v1104 = vlaneseq
    %v1105 = vshrl.u32 %v1104, 7
    %v1106 = vsub.s32 %v1103, %v1105
    %v1107 = vrot.slane %v1091, %v1106
    %v1109 = vunpack.c.l.s4 1966171168
    %v1110 = vunpack.c.0.s8 %v1109
    %v1111 = vlaneseq
    %v1112 = vshrl.u32 %v1111, 7
    %v1113 = vsub.s32 %v1110, %v1112
    %v1114 = vrot.slane %v1092, %v1113
    %v1116 = vunpack.c.l.s4 1966171168
    %v1117 = vunpack.c.0.s8 %v1116
    %v1118 = vlaneseq
    %v1119 = vshrl.u32 %v1118, 7
    %v1120 = vsub.s32 %v1117, %v1119
    %v1121 = vrot.slane %v1093, %v1120
    %v1122 = vcombine.low %v1100, %v1107
    %v1123 = vcombine.low %v1114, %v1121
    %v1125 = vunpack.c.l.s4 1966171168
    %v1126 = vunpack.c.0.s8 %v1125
    %v1127 = vlaneseq
    %v1128 = vshrl.u32 %v1127, 7
    %v1129 = vsub.s32 %v1126, %v1128
    %v1130 = vrot.slane %v1122, %v1129
    %v1132 = vunpack.c.l.s4 1966171168
    %v1133 = vunpack.c.0.s8 %v1132
    %v1134 = vlaneseq
    %v1135 = vshrl.u32 %v1134, 7
    %v1136 = vsub.s32 %v1133, %v1135
    %v1137 = vrot.slane %v1123, %v1136
    %v1138 = vcombine.low %v1130, %v1137
    %v1139 = vcombine.low %v545, %v549
    %v1140 = vcombine.low %v553, %v557
    %v1141 = vcombine.low %v561, %v565
    %v1142 = vcombine.low %v569, %v573
    %v1144 = vunpack.c.l.s4 1966171168
    %v1145 = vunpack.c.0.s8 %v1144
    %v1146 = vlaneseq
    %v1147 = vshrl.u32 %v1146, 7
    %v1148 = vsub.s32 %v1145, %v1147
    %v1149 = vrot.slane %v1139, %v1148
    %v1151 = vunpack.c.l.s4 1966171168
    %v1152 = vunpack.c.0.s8 %v1151
    %v1153 = vlaneseq
    %v1154 = vshrl.u32 %v1153, 7
    %v1155 = vsub.s32 %v1152, %v1154
    %v1156 = vrot.slane %v1140, %v1155
    %v1158 = vunpack.c.l.s4 1966171168
    %v1159 = vunpack.c.0.s8 %v1158
    %v1160 = vlaneseq
    %v1161 = vshrl.u32 %v1160, 7
    %v1162 = vsub.s32 %v1159, %v1161
    %v1163 = vrot.slane %v1141, %v1162
    %v1165 = vunpack.c.l.s4 1966171168
    %v1166 = vunpack.c.0.s8 %v1165
    %v1167 = vlaneseq
    %v1168 = vshrl.u32 %v1167, 7
    %v1169 = vsub.s32 %v1166, %v1168
    %v1170 = vrot.slane %v1142, %v1169
    %v1171 = vcombine.low %v1149, %v1156
    %v1172 = vcombine.low %v1163, %v1170
    %v1174 = vunpack.c.l.s4 1966171168
    %v1175 = vunpack.c.0.s8 %v1174
    %v1176 = vlaneseq
    %v1177 = vshrl.u32 %v1176, 7
    %v1178 = vsub.s32 %v1175, %v1177
    %v1179 = vrot.slane %v1171, %v1178
    %v1181 = vunpack.c.l.s4 1966171168
    %v1182 = vunpack.c.0.s8 %v1181
    %v1183 = vlaneseq
    %v1184 = vshrl.u32 %v1183, 7
    %v1185 = vsub.s32 %v1182, %v1184
    %v1186 = vrot.slane %v1172, %v1185
    %v1187 = vcombine.low %v1179, %v1186
    %v1188 = vcombine.low %v577, %v581
    %v1189 = vcombine.low %v585, %v589
    %v1190 = vcombine.low %v593, %v597
    %v1191 = vcombine.low %v601, %v605
    %v1193 = vunpack.c.l.s4 1966171168
    %v1194 = vunpack.c.0.s8 %v1193
    %v1195 = vlaneseq
    %v1196 = vshrl.u32 %v1195, 7
    %v1197 = vsub.s32 %v1194, %v1196
    %v1198 = vrot.slane %v1188, %v1197
    %v1200 = vunpack.c.l.s4 1966171168
    %v1201 = vunpack.c.0.s8 %v1200
    %v1202 = vlaneseq
    %v1203 = vshrl.u32 %v1202, 7
    %v1204 = vsub.s32 %v1201, %v1203
    %v1205 = vrot.slane %v1189, %v1204
    %v1207 = vunpack.c.l.s4 1966171168
    %v1208 = vunpack.c.0.s8 %v1207
    %v1209 = vlaneseq
    %v1210 = vshrl.u32 %v1209, 7
    %v1211 = vsub.s32 %v1208, %v1210
    %v1212 = vrot.slane %v1190, %v1211
    %v1214 = vunpack.c.l.s4 1966171168
    %v1215 = vunpack.c.0.s8 %v1214
    %v1216 = vlaneseq
    %v1217 = vshrl.u32 %v1216, 7
    %v1218 = vsub.s32 %v1215, %v1217
    %v1219 = vrot.slane %v1191, %v1218
    %v1220 = vcombine.low %v1198, %v1205
    %v1221 = vcombine.low %v1212, %v1219
    %v1223 = vunpack.c.l.s4 1966171168
    %v1224 = vunpack.c.0.s8 %v1223
    %v1225 = vlaneseq
    %v1226 = vshrl.u32 %v1225, 7
    %v1227 = vsub.s32 %v1224, %v1226
    %v1228 = vrot.slane %v1220, %v1227
    %v1230 = vunpack.c.l.s4 1966171168
    %v1231 = vunpack.c.0.s8 %v1230
    %v1232 = vlaneseq
    %v1233 = vshrl.u32 %v1232, 7
    %v1234 = vsub.s32 %v1231, %v1233
    %v1235 = vrot.slane %v1221, %v1234
    %v1236 = vcombine.low %v1228, %v1235
    %v1237 = vcombine.low %v609, %v613
    %v1238 = vcombine.low %v617, %v621
    %v1239 = vcombine.low %v625, %v629
    %v1240 = vcombine.low %v633, %v637
    %v1242 = vunpack.c.l.s4 1966171168
    %v1243 = vunpack.c.0.s8 %v1242
    %v1244 = vlaneseq
    %v1245 = vshrl.u32 %v1244, 7
    %v1246 = vsub.s32 %v1243, %v1245
    %v1247 = vrot.slane %v1237, %v1246
    %v1249 = vunpack.c.l.s4 1966171168
    %v1250 = vunpack.c.0.s8 %v1249
    %v1251 = vlaneseq
    %v1252 = vshrl.u32 %v1251, 7
    %v1253 = vsub.s32 %v1250, %v1252
    %v1254 = vrot.slane %v1238, %v1253
    %v1256 = vunpack.c.l.s4 1966171168
    %v1257 = vunpack.c.0.s8 %v1256
    %v1258 = vlaneseq
    %v1259 = vshrl.u32 %v1258, 7
    %v1260 = vsub.s32 %v1257, %v1259
    %v1261 = vrot.slane %v1239, %v1260
    %v1263 = vunpack.c.l.s4 1966171168
    %v1264 = vunpack.c.0.s8 %v1263
    %v1265 = vlaneseq
    %v1266 = vshrl.u32 %v1265, 7
    %v1267 = vsub.s32 %v1264, %v1266
    %v1268 = vrot.slane %v1240, %v1267
    %v1269 = vcombine.low %v1247, %v1254
    %v1270 = vcombine.low %v1261, %v1268
    %v1272 = vunpack.c.l.s4 1966171168
    %v1273 = vunpack.c.0.s8 %v1272
    %v1274 = vlaneseq
    %v1275 = vshrl.u32 %v1274, 7
    %v1276 = vsub.s32 %v1273, %v1275
    %v1277 = vrot.slane %v1269, %v1276
    %v1279 = vunpack.c.l.s4 1966171168
    %v1280 = vunpack.c.0.s8 %v1279
    %v1281 = vlaneseq
    %v1282 = vshrl.u32 %v1281, 7
    %v1283 = vsub.s32 %v1280, %v1282
    %v1284 = vrot.slane %v1270, %v1283
    %v1285 = vcombine.low %v1277, %v1284
    %v1286 = vcombine.low %v641, %v645
    %v1287 = vcombine.low %v649, %v653
    %v1288 = vcombine.low %v657, %v661
    %v1289 = vcombine.low %v665, %v669
    %v1291 = vunpack.c.l.s4 1966171168
    %v1292 = vunpack.c.0.s8 %v1291
    %v1293 = vlaneseq
    %v1294 = vshrl.u32 %v1293, 7
    %v1295 = vsub.s32 %v1292, %v1294
    %v1296 = vrot.slane %v1286, %v1295
    %v1298 = vunpack.c.l.s4 1966171168
    %v1299 = vunpack.c.0.s8 %v1298
    %v1300 = vlaneseq
    %v1301 = vshrl.u32 %v1300, 7
    %v1302 = vsub.s32 %v1299, %v1301
    %v1303 = vrot.slane %v1287, %v1302
    %v1305 = vunpack.c.l.s4 1966171168
    %v1306 = vunpack.c.0.s8 %v1305
    %v1307 = vlaneseq
    %v1308 = vshrl.u32 %v1307, 7
    %v1309 = vsub.s32 %v1306, %v1308
    %v1310 = vrot.slane %v1288, %v1309
    %v1312 = vunpack.c.l.s4 1966171168
    %v1313 = vunpack.c.0.s8 %v1312
    %v1314 = vlaneseq
    %v1315 = vshrl.u32 %v1314, 7
    %v1316 = vsub.s32 %v1313, %v1315
    %v1317 = vrot.slane %v1289, %v1316
    %v1318 = vcombine.low %v1296, %v1303
    %v1319 = vcombine.low %v1310, %v1317
    %v1321 = vunpack.c.l.s4 1966171168
    %v1322 = vunpack.c.0.s8 %v1321
    %v1323 = vlaneseq
    %v1324 = vshrl.u32 %v1323, 7
    %v1325 = vsub.s32 %v1322, %v1324
    %v1326 = vrot.slane %v1318, %v1325
    %v1328 = vunpack.c.l.s4 1966171168
    %v1329 = vunpack.c.0.s8 %v1328
    %v1330 = vlaneseq
    %v1331 = vshrl.u32 %v1330, 7
    %v1332 = vsub.s32 %v1329, %v1331
    %v1333 = vrot.slane %v1319, %v1332
    %v1334 = vcombine.low %v1326, %v1333
    %v1335 = vcombine.low %v673, %v677
    %v1336 = vcombine.low %v681, %v685
    %v1337 = vcombine.low %v689, %v693
    %v1338 = vcombine.low %v697, %v701
    %v1340 = vunpack.c.l.s4 1966171168
    %v1341 = vunpack.c.0.s8 %v1340
    %v1342 = vlaneseq
    %v1343 = vshrl.u32 %v1342, 7
    %v1344 = vsub.s32 %v1341, %v1343
    %v1345 = vrot.slane %v1335, %v1344
    %v1347 = vunpack.c.l.s4 1966171168
    %v1348 = vunpack.c.0.s8 %v1347
    %v1349 = vlaneseq
    %v1350 = vshrl.u32 %v1349, 7
    %v1351 = vsub.s32 %v1348, %v1350
    %v1352 = vrot.slane %v1336, %v1351
    %v1354 = vunpack.c.l.s4 1966171168
    %v1355 = vunpack.c.0.s8 %v1354
    %v1356 = vlaneseq
    %v1357 = vshrl.u32 %v1356, 7
    %v1358 = vsub.s32 %v1355, %v1357
    %v1359 = vrot.slane %v1337, %v1358
    %v1361 = vunpack.c.l.s4 1966171168
    %v1362 = vunpack.c.0.s8 %v1361
    %v1363 = vlaneseq
    %v1364 = vshrl.u32 %v1363, 7
    %v1365 = vsub.s32 %v1362, %v1364
    %v1366 = vrot.slane %v1338, %v1365
    %v1367 = vcombine.low %v1345, %v1352
    %v1368 = vcombine.low %v1359, %v1366
    %v1370 = vunpack.c.l.s4 1966171168
    %v1371 = vunpack.c.0.s8 %v1370
    %v1372 = vlaneseq
    %v1373 = vshrl.u32 %v1372, 7
    %v1374 = vsub.s32 %v1371, %v1373
    %v1375 = vrot.slane %v1367, %v1374
    %v1377 = vunpack.c.l.s4 1966171168
    %v1378 = vunpack.c.0.s8 %v1377
    %v1379 = vlaneseq
    %v1380 = vshrl.u32 %v1379, 7
    %v1381 = vsub.s32 %v1378, %v1380
    %v1382 = vrot.slane %v1368, %v1381
    %v1383 = vcombine.low %v1375, %v1382
    %v1384 = vcombine.low %v705, %v709
    %v1385 = vcombine.low %v713, %v717
    %v1386 = vcombine.low %v721, %v725
    %v1387 = vcombine.low %v729, %v733
    %v1389 = vunpack.c.l.s4 1966171168
    %v1390 = vunpack.c.0.s8 %v1389
    %v1391 = vlaneseq
    %v1392 = vshrl.u32 %v1391, 7
    %v1393 = vsub.s32 %v1390, %v1392
    %v1394 = vrot.slane %v1384, %v1393
    %v1396 = vunpack.c.l.s4 1966171168
    %v1397 = vunpack.c.0.s8 %v1396
    %v1398 = vlaneseq
    %v1399 = vshrl.u32 %v1398, 7
    %v1400 = vsub.s32 %v1397, %v1399
    %v1401 = vrot.slane %v1385, %v1400
    %v1403 = vunpack.c.l.s4 1966171168
    %v1404 = vunpack.c.0.s8 %v1403
    %v1405 = vlaneseq
    %v1406 = vshrl.u32 %v1405, 7
    %v1407 = vsub.s32 %v1404, %v1406
    %v1408 = vrot.slane %v1386, %v1407
    %v1410 = vunpack.c.l.s4 1966171168
    %v1411 = vunpack.c.0.s8 %v1410
    %v1412 = vlaneseq
    %v1413 = vshrl.u32 %v1412, 7
    %v1414 = vsub.s32 %v1411, %v1413
    %v1415 = vrot.slane %v1387, %v1414
    %v1416 = vcombine.low %v1394, %v1401
    %v1417 = vcombine.low %v1408, %v1415
    %v1419 = vunpack.c.l.s4 1966171168
    %v1420 = vunpack.c.0.s8 %v1419
    %v1421 = vlaneseq
    %v1422 = vshrl.u32 %v1421, 7
    %v1423 = vsub.s32 %v1420, %v1422
    %v1424 = vrot.slane %v1416, %v1423
    %v1426 = vunpack.c.l.s4 1966171168
    %v1427 = vunpack.c.0.s8 %v1426
    %v1428 = vlaneseq
    %v1429 = vshrl.u32 %v1428, 7
    %v1430 = vsub.s32 %v1427, %v1429
    %v1431 = vrot.slane %v1417, %v1430
    %v1432 = vcombine.low %v1424, %v1431
    %v1433 = vcombine.low %v737, %v741
    %v1434 = vcombine.low %v745, %v749
    %v1435 = vcombine.low %v753, %v757
    %v1436 = vcombine.low %v761, %v765
    %v1438 = vunpack.c.l.s4 1966171168
    %v1439 = vunpack.c.0.s8 %v1438
    %v1440 = vlaneseq
    %v1441 = vshrl.u32 %v1440, 7
    %v1442 = vsub.s32 %v1439, %v1441
    %v1443 = vrot.slane %v1433, %v1442
    %v1445 = vunpack.c.l.s4 1966171168
    %v1446 = vunpack.c.0.s8 %v1445
    %v1447 = vlaneseq
    %v1448 = vshrl.u32 %v1447, 7
    %v1449 = vsub.s32 %v1446, %v1448
    %v1450 = vrot.slane %v1434, %v1449
    %v1452 = vunpack.c.l.s4 1966171168
    %v1453 = vunpack.c.0.s8 %v1452
    %v1454 = vlaneseq
    %v1455 = vshrl.u32 %v1454, 7
    %v1456 = vsub.s32 %v1453, %v1455
    %v1457 = vrot.slane %v1435, %v1456
    %v1459 = vunpack.c.l.s4 1966171168
    %v1460 = vunpack.c.0.s8 %v1459
    %v1461 = vlaneseq
    %v1462 = vshrl.u32 %v1461, 7
    %v1463 = vsub.s32 %v1460, %v1462
    %v1464 = vrot.slane %v1436, %v1463
    %v1465 = vcombine.low %v1443, %v1450
    %v1466 = vcombine.low %v1457, %v1464
    %v1468 = vunpack.c.l.s4 1966171168
    %v1469 = vunpack.c.0.s8 %v1468
    %v1470 = vlaneseq
    %v1471 = vshrl.u32 %v1470, 7
    %v1472 = vsub.s32 %v1469, %v1471
    %v1473 = vrot.slane %v1465, %v1472
    %v1475 = vunpack.c.l.s4 1966171168
    %v1476 = vunpack.c.0.s8 %v1475
    %v1477 = vlaneseq
    %v1478 = vshrl.u32 %v1477, 7
    %v1479 = vsub.s32 %v1476, %v1478
    %v1480 = vrot.slane %v1466, %v1479
    %v1481 = vcombine.low %v1473, %v1480
    %v1482 = vcombine.low %v769, %v773
    %v1483 = vcombine.low %v777, %v781
    %v1484 = vcombine.low %v785, %v789
    %v1485 = vcombine.low %v793, %v797
    %v1487 = vunpack.c.l.s4 1966171168
    %v1488 = vunpack.c.0.s8 %v1487
    %v1489 = vlaneseq
    %v1490 = vshrl.u32 %v1489, 7
    %v1491 = vsub.s32 %v1488, %v1490
    %v1492 = vrot.slane %v1482, %v1491
    %v1494 = vunpack.c.l.s4 1966171168
    %v1495 = vunpack.c.0.s8 %v1494
    %v1496 = vlaneseq
    %v1497 = vshrl.u32 %v1496, 7
    %v1498 = vsub.s32 %v1495, %v1497
    %v1499 = vrot.slane %v1483, %v1498
    %v1501 = vunpack.c.l.s4 1966171168
    %v1502 = vunpack.c.0.s8 %v1501
    %v1503 = vlaneseq
    %v1504 = vshrl.u32 %v1503, 7
    %v1505 = vsub.s32 %v1502, %v1504
    %v1506 = vrot.slane %v1484, %v1505
    %v1508 = vunpack.c.l.s4 1966171168
    %v1509 = vunpack.c.0.s8 %v1508
    %v1510 = vlaneseq
    %v1511 = vshrl.u32 %v1510, 7
    %v1512 = vsub.s32 %v1509, %v1511
    %v1513 = vrot.slane %v1485, %v1512
    %v1514 = vcombine.low %v1492, %v1499
    %v1515 = vcombine.low %v1506, %v1513
    %v1517 = vunpack.c.l.s4 1966171168
    %v1518 = vunpack.c.0.s8 %v1517
    %v1519 = vlaneseq
    %v1520 = vshrl.u32 %v1519, 7
    %v1521 = vsub.s32 %v1518, %v1520
    %v1522 = vrot.slane %v1514, %v1521
    %v1524 = vunpack.c.l.s4 1966171168
    %v1525 = vunpack.c.0.s8 %v1524
    %v1526 = vlaneseq
    %v1527 = vshrl.u32 %v1526, 7
    %v1528 = vsub.s32 %v1525, %v1527
    %v1529 = vrot.slane %v1515, %v1528
    %v1530 = vcombine.low %v1522, %v1529
    %v1531 = vcombine.low %v801, %v805
    %v1532 = vcombine.low %v809, %v813
    %v1533 = vcombine.low %v817, %v821
    %v1534 = vcombine.low %v825, %v829
    %v1536 = vunpack.c.l.s4 1966171168
    %v1537 = vunpack.c.0.s8 %v1536
    %v1538 = vlaneseq
    %v1539 = vshrl.u32 %v1538, 7
    %v1540 = vsub.s32 %v1537, %v1539
    %v1541 = vrot.slane %v1531, %v1540
    %v1543 = vunpack.c.l.s4 1966171168
    %v1544 = vunpack.c.0.s8 %v1543
    %v1545 = vlaneseq
    %v1546 = vshrl.u32 %v1545, 7
    %v1547 = vsub.s32 %v1544, %v1546
    %v1548 = vrot.slane %v1532, %v1547
    %v1550 = vunpack.c.l.s4 1966171168
    %v1551 = vunpack.c.0.s8 %v1550
    %v1552 = vlaneseq
    %v1553 = vshrl.u32 %v1552, 7
    %v1554 = vsub.s32 %v1551, %v1553
    %v1555 = vrot.slane %v1533, %v1554
    %v1557 = vunpack.c.l.s4 1966171168
    %v1558 = vunpack.c.0.s8 %v1557
    %v1559 = vlaneseq
    %v1560 = vshrl.u32 %v1559, 7
    %v1561 = vsub.s32 %v1558, %v1560
    %v1562 = vrot.slane %v1534, %v1561
    %v1563 = vcombine.low %v1541, %v1548
    %v1564 = vcombine.low %v1555, %v1562
    %v1566 = vunpack.c.l.s4 1966171168
    %v1567 = vunpack.c.0.s8 %v1566
    %v1568 = vlaneseq
    %v1569 = vshrl.u32 %v1568, 7
    %v1570 = vsub.s32 %v1567, %v1569
    %v1571 = vrot.slane %v1563, %v1570
    %v1573 = vunpack.c.l.s4 1966171168
    %v1574 = vunpack.c.0.s8 %v1573
    %v1575 = vlaneseq
    %v1576 = vshrl.u32 %v1575, 7
    %v1577 = vsub.s32 %v1574, %v1576
    %v1578 = vrot.slane %v1564, %v1577
    %v1579 = vcombine.low %v1571, %v1578
    %v1580 = vcombine.low %v833, %v837
    %v1581 = vcombine.low %v841, %v845
    %v1582 = vcombine.low %v849, %v853
    %v1583 = vcombine.low %v857, %v861
    %v1585 = vunpack.c.l.s4 1966171168
    %v1586 = vunpack.c.0.s8 %v1585
    %v1587 = vlaneseq
    %v1588 = vshrl.u32 %v1587, 7
    %v1589 = vsub.s32 %v1586, %v1588
    %v1590 = vrot.slane %v1580, %v1589
    %v1592 = vunpack.c.l.s4 1966171168
    %v1593 = vunpack.c.0.s8 %v1592
    %v1594 = vlaneseq
    %v1595 = vshrl.u32 %v1594, 7
    %v1596 = vsub.s32 %v1593, %v1595
    %v1597 = vrot.slane %v1581, %v1596
    %v1599 = vunpack.c.l.s4 1966171168
    %v1600 = vunpack.c.0.s8 %v1599
    %v1601 = vlaneseq
    %v1602 = vshrl.u32 %v1601, 7
    %v1603 = vsub.s32 %v1600, %v1602
    %v1604 = vrot.slane %v1582, %v1603
    %v1606 = vunpack.c.l.s4 1966171168
    %v1607 = vunpack.c.0.s8 %v1606
    %v1608 = vlaneseq
    %v1609 = vshrl.u32 %v1608, 7
    %v1610 = vsub.s32 %v1607, %v1609
    %v1611 = vrot.slane %v1583, %v1610
    %v1612 = vcombine.low %v1590, %v1597
    %v1613 = vcombine.low %v1604, %v1611
    %v1615 = vunpack.c.l.s4 1966171168
    %v1616 = vunpack.c.0.s8 %v1615
    %v1617 = vlaneseq
    %v1618 = vshrl.u32 %v1617, 7
    %v1619 = vsub.s32 %v1616, %v1618
    %v1620 = vrot.slane %v1612, %v1619
    %v1622 = vunpack.c.l.s4 1966171168
    %v1623 = vunpack.c.0.s8 %v1622
    %v1624 = vlaneseq
    %v1625 = vshrl.u32 %v1624, 7
    %v1626 = vsub.s32 %v1623, %v1625
    %v1627 = vrot.slane %v1613, %v1626
    %v1628 = vcombine.low %v1620, %v1627
    %v1629 = vcombine.low %v865, %v869
    %v1630 = vcombine.low %v873, %v877
    %v1631 = vcombine.low %v881, %v885
    %v1632 = vcombine.low %v889, %v893
    %v1634 = vunpack.c.l.s4 1966171168
    %v1635 = vunpack.c.0.s8 %v1634
    %v1636 = vlaneseq
    %v1637 = vshrl.u32 %v1636, 7
    %v1638 = vsub.s32 %v1635, %v1637
    %v1639 = vrot.slane %v1629, %v1638
    %v1641 = vunpack.c.l.s4 1966171168
    %v1642 = vunpack.c.0.s8 %v1641
    %v1643 = vlaneseq
    %v1644 = vshrl.u32 %v1643, 7
    %v1645 = vsub.s32 %v1642, %v1644
    %v1646 = vrot.slane %v1630, %v1645
    %v1648 = vunpack.c.l.s4 1966171168
    %v1649 = vunpack.c.0.s8 %v1648
    %v1650 = vlaneseq
    %v1651 = vshrl.u32 %v1650, 7
    %v1652 = vsub.s32 %v1649, %v1651
    %v1653 = vrot.slane %v1631, %v1652
    %v1655 = vunpack.c.l.s4 1966171168
    %v1656 = vunpack.c.0.s8 %v1655
    %v1657 = vlaneseq
    %v1658 = vshrl.u32 %v1657, 7
    %v1659 = vsub.s32 %v1656, %v1658
    %v1660 = vrot.slane %v1632, %v1659
    %v1661 = vcombine.low %v1639, %v1646
    %v1662 = vcombine.low %v1653, %v1660
    %v1664 = vunpack.c.l.s4 1966171168
    %v1665 = vunpack.c.0.s8 %v1664
    %v1666 = vlaneseq
    %v1667 = vshrl.u32 %v1666, 7
    %v1668 = vsub.s32 %v1665, %v1667
    %v1669 = vrot.slane %v1661, %v1668
    %v1671 = vunpack.c.l.s4 1966171168
    %v1672 = vunpack.c.0.s8 %v1671
    %v1673 = vlaneseq
    %v1674 = vshrl.u32 %v1673, 7
    %v1675 = vsub.s32 %v1672, %v1674
    %v1676 = vrot.slane %v1662, %v1675
    %v1677 = vcombine.low %v1669, %v1676
    %1678 = vset.pattern.permute.xlu0 0
    %1679 = vperm.xlu0 %1678, %v942
    %v1680 = vpop.permute.xlu0 %1679
    %1681 = vset.pattern.permute.xlu0 0
    %1682 = vperm.xlu0 %1681, %v991
    %v1683 = vpop.permute.xlu0 %1682
    %1684 = vset.pattern.permute.xlu0 0
    %1685 = vperm.xlu0 %1684, %v1040
    %v1686 = vpop.permute.xlu0 %1685
    %1687 = vset.pattern.permute.xlu0 0
    %1688 = vperm.xlu0 %1687, %v1089
    %v1689 = vpop.permute.xlu0 %1688
    %1690 = vset.pattern.permute.xlu0 0
    %1691 = vperm.xlu0 %1690, %v1138
    %v1692 = vpop.permute.xlu0 %1691
    %1693 = vset.pattern.permute.xlu0 0
    %1694 = vperm.xlu0 %1693, %v1187
    %v1695 = vpop.permute.xlu0 %1694
    %1696 = vset.pattern.permute.xlu0 0
    %1697 = vperm.xlu0 %1696, %v1236
    %v1698 = vpop.permute.xlu0 %1697
    %1699 = vset.pattern.permute.xlu0 0
    %1700 = vperm.xlu0 %1699, %v1285
    %v1701 = vpop.permute.xlu0 %1700
    %1702 = vset.pattern.permute.xlu0 0
    %1703 = vperm.xlu0 %1702, %v1334
    %v1704 = vpop.permute.xlu0 %1703
    %1705 = vset.pattern.permute.xlu0 0
    %1706 = vperm.xlu0 %1705, %v1383
    %v1707 = vpop.permute.xlu0 %1706
    %1708 = vset.pattern.permute.xlu0 0
    %1709 = vperm.xlu0 %1708, %v1432
    %v1710 = vpop.permute.xlu0 %1709
    %1711 = vset.pattern.permute.xlu0 0
    %1712 = vperm.xlu0 %1711, %v1481
    %v1713 = vpop.permute.xlu0 %1712
    %1714 = vset.pattern.permute.xlu0 0
    %1715 = vperm.xlu0 %1714, %v1530
    %v1716 = vpop.permute.xlu0 %1715
    %1717 = vset.pattern.permute.xlu0 0
    %1718 = vperm.xlu0 %1717, %v1579
    %v1719 = vpop.permute.xlu0 %1718
    %1720 = vset.pattern.permute.xlu0 0
    %1721 = vperm.xlu0 %1720, %v1628
    %v1722 = vpop.permute.xlu0 %1721
    %1723 = vset.pattern.permute.xlu0 0
    %1724 = vperm.xlu0 %1723, %v1677
    %v1725 = vpop.permute.xlu0 %1724
    %v1726 = vlaneseq
    %v1727 = vand.u32 %v1726, 127
    %v1728 = vlaneseq
    %v1729 = vshrl.u32 %v1728, 7
    %v1730 = vsub.s32 %v1727, %v1729
    %v1731 = vrot.slane %v1680, %v1730
    %v1732 = vadd.s32 %v1727, 4294967288
    %v1733 = vlaneseq
    %v1734 = vshrl.u32 %v1733, 7
    %v1735 = vsub.s32 %v1732, %v1734
    %v1736 = vrot.slane %v1683, %v1735
    %vm1737 = vcmask 130112
    %v1738 = vsel %vm1737, %v1736, %v1731
    %v1739 = vadd.s32 %v1727, 4294967280
    %v1740 = vlaneseq
    %v1741 = vshrl.u32 %v1740, 7
    %v1742 = vsub.s32 %v1739, %v1741
    %v1743 = vrot.slane %v1686, %v1742
    %vm1744 = vcmask 195712
    %v1745 = vsel %vm1744, %v1743, %v1738
    %v1746 = vadd.s32 %v1727, 4294967272
    %v1747 = vlaneseq
    %v1748 = vshrl.u32 %v1747, 7
    %v1749 = vsub.s32 %v1746, %v1748
    %v1750 = vrot.slane %v1689, %v1749
    %vm1751 = vcmask 261312
    %v1752 = vsel %vm1751, %v1750, %v1745
    %v1753 = vadd.s32 %v1727, 4294967264
    %v1754 = vlaneseq
    %v1755 = vshrl.u32 %v1754, 7
    %v1756 = vsub.s32 %v1753, %v1755
    %v1757 = vrot.slane %v1692, %v1756
    %vm1758 = vcmask 326912
    %v1759 = vsel %vm1758, %v1757, %v1752
    %v1760 = vadd.s32 %v1727, 4294967256
    %v1761 = vlaneseq
    %v1762 = vshrl.u32 %v1761, 7
    %v1763 = vsub.s32 %v1760, %v1762
    %v1764 = vrot.slane %v1695, %v1763
    %vm1765 = vcmask 392512
    %v1766 = vsel %vm1765, %v1764, %v1759
    %v1767 = vadd.s32 %v1727, 4294967248
    %v1768 = vlaneseq
    %v1769 = vshrl.u32 %v1768, 7
    %v1770 = vsub.s32 %v1767, %v1769
    %v1771 = vrot.slane %v1698, %v1770
    %vm1772 = vcmask 458112
    %v1773 = vsel %vm1772, %v1771, %v1766
    %v1774 = vadd.s32 %v1727, 4294967240
    %v1775 = vlaneseq
    %v1776 = vshrl.u32 %v1775, 7
    %v1777 = vsub.s32 %v1774, %v1776
    %v1778 = vrot.slane %v1701, %v1777
    %vm1779 = vcmask 523712
    %v1780 = vsel %vm1779, %v1778, %v1773
    %v1781 = vadd.s32 %v1727, 4294967232
    %v1782 = vlaneseq
    %v1783 = vshrl.u32 %v1782, 7
    %v1784 = vsub.s32 %v1781, %v1783
    %v1785 = vrot.slane %v1704, %v1784
    %vm1786 = vcmask 589312
    %v1787 = vsel %vm1786, %v1785, %v1780
    %v1788 = vadd.s32 %v1727, 4294967224
    %v1789 = vlaneseq
    %v1790 = vshrl.u32 %v1789, 7
    %v1791 = vsub.s32 %v1788, %v1790
    %v1792 = vrot.slane %v1707, %v1791
    %vm1793 = vcmask 654912
    %v1794 = vsel %vm1793, %v1792, %v1787
    %v1795 = vadd.s32 %v1727, 4294967216
    %v1796 = vlaneseq
    %v1797 = vshrl.u32 %v1796, 7
    %v1798 = vsub.s32 %v1795, %v1797
    %v1799 = vrot.slane %v1710, %v1798
    %vm1800 = vcmask 720512
    %v1801 = vsel %vm1800, %v1799, %v1794
    %v1802 = vadd.s32 %v1727, 4294967208
    %v1803 = vlaneseq
    %v1804 = vshrl.u32 %v1803, 7
    %v1805 = vsub.s32 %v1802, %v1804
    %v1806 = vrot.slane %v1713, %v1805
    %vm1807 = vcmask 786112
    %v1808 = vsel %vm1807, %v1806, %v1801
    %v1809 = vadd.s32 %v1727, 4294967200
    %v1810 = vlaneseq
    %v1811 = vshrl.u32 %v1810, 7
    %v1812 = vsub.s32 %v1809, %v1811
    %v1813 = vrot.slane %v1716, %v1812
    %vm1814 = vcmask 851712
    %v1815 = vsel %vm1814, %v1813, %v1808
    %v1816 = vadd.s32 %v1727, 4294967192
    %v1817 = vlaneseq
    %v1818 = vshrl.u32 %v1817, 7
    %v1819 = vsub.s32 %v1816, %v1818
    %v1820 = vrot.slane %v1719, %v1819
    %vm1821 = vcmask 917312
    %v1822 = vsel %vm1821, %v1820, %v1815
    %v1823 = vadd.s32 %v1727, 4294967184
    %v1824 = vlaneseq
    %v1825 = vshrl.u32 %v1824, 7
    %v1826 = vsub.s32 %v1823, %v1825
    %v1827 = vrot.slane %v1722, %v1826
    %vm1828 = vcmask 982912
    %v1829 = vsel %vm1828, %v1827, %v1822
    %v1830 = vadd.s32 %v1727, 4294967176
    %v1831 = vlaneseq
    %v1832 = vshrl.u32 %v1831, 7
    %v1833 = vsub.s32 %v1830, %v1832
    %v1834 = vrot.slane %v1725, %v1833
    %vm1835 = vcmask 1048512
    %v1836 = vsel %vm1835, %v1834, %v1829
    %v1838 = vunpack.c.l.s4 1966171168
    %v1839 = vunpack.c.0.s8 %v1838
    %v1840 = vlaneseq
    %v1841 = vshrl.u32 %v1840, 7
    %v1842 = vsub.s32 %v1839, %v1841
    %v1843 = vrot.slane %v1836, %v1842
    %v1845 = vunpack.c.l.s4 1966171168
    %v1846 = vunpack.c.0.s8 %v1845
    %v1847 = vlaneseq
    %v1848 = vshrl.u32 %v1847, 7
    %v1849 = vsub.s32 %v1846, %v1848
    %v1850 = vrot.slane %v1843, %v1849
    %v1852 = vsel %vm365, %v1850, 0.0
    %1853 = vst [vmem:[#allocation2] sm:$0x1] %v1852
    %v1854 = vsel %vm363, 1, 0
    %v1855 = vcvt.s32.f32 %v1854
    %v1856 = vsel %vm364, 1, 0
    %v1857 = vcvt.s32.f32 %v1856
    %v1858 = vld [vmem:[#allocation3] sm:$0x1]
    %v1859 = vadd.f32 %v1855, 0.0
    %v1860 = vadd.f32 %v1858, %v1859
    %1861 = vst [vmem:[#allocation3] sm:$0x1] %v1860
    %v1862 = vld [vmem:[#allocation4] sm:$0x1]
    %v1863 = vadd.f32 %v1857, 0.0
    %v1864 = vadd.f32 %v1862, %v1863
    %1865 = vst [vmem:[#allocation4] sm:$0x1] %v1864
    %v1866 = vld [vmem:[#allocation5] sm:$0x1]
    %v1867 = vmul.f32 %v1852, %v1855
    %v1868 = vadd.f32 %v1867, 0.0
    %v1869 = vadd.f32 %v1866, %v1868
    %1870 = vst [vmem:[#allocation5] sm:$0x1] %v1869
    %v1871 = vld [vmem:[#allocation6] sm:$0x1]
    %v1872 = vmul.f32 %v1852, %v1857
    %v1873 = vadd.f32 %v1872, 0.0
    %v1874 = vadd.f32 %v1871, %v1873
    %1875 = vst [vmem:[#allocation6] sm:$0x1] %v1874
    %v1876 = vld [vmem:[#allocation7] sm:$0x1]
    %v1877 = vsel %vm363, %v1852, -inf
    %v1878 = vmax.f32 %v1876, %v1877
    %1879 = vst [vmem:[#allocation7] sm:$0x1] %v1878
    %v1880 = vld [vmem:[#allocation8] sm:$0x1]
    %v1881 = vsel %vm364, %v1852, inf
    %v1882 = vmin.f32 %v1880, %v1881
    %1883 = vst [vmem:[#allocation8] sm:$0x1] %v1882
    // Predicated region
    $region18: #{tpu_custom_call.1} parent=1 // pred_check
      %p1884 = pneg %p15
    $region19: #{tpu_custom_call.1} parent=1 // pred_check_branch
      %1886 = sbr.rel (%p1884) target = $region21
    $region20: #{tpu_custom_call.1} parent=1 // pred_region
      %v1887 = vld [vmem:[#allocation3] sm:$0x1]
      %vm1888 = vcmask 1040384
      %v1889 = vsel %vm1888, %v1887, 0.0
      %1890 = vadd.xlane.f32.xlu0 %v1889
      %v1891 = vpop.xlane.xlu0 %1890
      %v1892 = vrot.slane %v1891, 4
      %v1893 = vadd.f32 %v1891, %v1892
      %v1894 = vrot.slane %v1893, 2
      %v1895 = vadd.f32 %v1893, %v1894
      %v1896 = vrot.slane %v1895, 1
      %v1897 = vadd.f32 %v1895, %v1896
      %s1898 = vtos %v1897
      %v1899 = vstv %s1898
      %v1900 = vld [vmem:[#allocation4] sm:$0x1]
      %v1901 = vsel %vm1888, %v1900, 0.0
      %1902 = vadd.xlane.f32.xlu0 %v1901
      %v1903 = vpop.xlane.xlu0 %1902
      %v1904 = vrot.slane %v1903, 4
      %v1905 = vadd.f32 %v1903, %v1904
      %v1906 = vrot.slane %v1905, 2
      %v1907 = vadd.f32 %v1905, %v1906
      %v1908 = vrot.slane %v1907, 1
      %v1909 = vadd.f32 %v1907, %v1908
      %s1910 = vtos %v1909
      %v1911 = vstv %s1910
      %v1912 = vld [vmem:[#allocation5] sm:$0x1]
      %v1913 = vsel %vm1888, %v1912, 0.0
      %1914 = vadd.xlane.f32.xlu0 %v1913
      %v1915 = vpop.xlane.xlu0 %1914
      %v1916 = vrot.slane %v1915, 4
      %v1917 = vadd.f32 %v1915, %v1916
      %v1918 = vrot.slane %v1917, 2
      %v1919 = vadd.f32 %v1917, %v1918
      %v1920 = vrot.slane %v1919, 1
      %v1921 = vadd.f32 %v1919, %v1920
      %s1922 = vtos %v1921
      %v1923 = vstv %s1922
      %v1924 = vld [vmem:[#allocation6] sm:$0x1]
      %v1925 = vsel %vm1888, %v1924, 0.0
      %1926 = vadd.xlane.f32.xlu0 %v1925
      %v1927 = vpop.xlane.xlu0 %1926
      %v1928 = vrot.slane %v1927, 4
      %v1929 = vadd.f32 %v1927, %v1928
      %v1930 = vrot.slane %v1929, 2
      %v1931 = vadd.f32 %v1929, %v1930
      %v1932 = vrot.slane %v1931, 1
      %v1933 = vadd.f32 %v1931, %v1932
      %s1934 = vtos %v1933
      %v1935 = vstv %s1934
      %v1936 = vld [vmem:[#allocation7] sm:$0x1]
      %v1937 = vsel %vm1888, %v1936, -inf
      %1938 = vmax.xlane.f32.xlu0 %v1937
      %v1939 = vpop.xlane.xlu0 %1938
      %v1940 = vrot.slane %v1939, 4
      %v1941 = vmax.f32 %v1939, %v1940
      %v1942 = vrot.slane %v1941, 2
      %v1943 = vmax.f32 %v1941, %v1942
      %v1944 = vrot.slane %v1943, 1
      %v1945 = vmax.f32 %v1943, %v1944
      %s1946 = vtos %v1945
      %v1947 = vstv %s1946
      %v1948 = vld [vmem:[#allocation8] sm:$0x1]
      %v1949 = vsel %vm1888, %v1948, inf
      %1950 = vmin.xlane.f32.xlu0 %v1949
      %v1951 = vpop.xlane.xlu0 %1950
      %v1952 = vrot.slane %v1951, 4
      %v1953 = vmin.f32 %v1951, %v1952
      %v1954 = vrot.slane %v1953, 2
      %v1955 = vmin.f32 %v1953, %v1954
      %v1956 = vrot.slane %v1955, 1
      %v1957 = vmin.f32 %v1955, %v1956
      %s1958 = vtos %v1957
      %v1959 = vstv %s1958
      %v1960 = vmax.f32 %v1899, 1.0
      %v1961 = vrcp.pop %v1960
      %v1962 = vmul.f32 %v1923, %v1961
      %v1963 = vmax.f32 %v1911, 1.0
      %v1964 = vrcp.pop %v1963
      %v1965 = vmul.f32 %v1935, %v1964
      %vm1966 = vcmp.gt.f32.partialorder %v1899, 1.0
      %v1967 = vsel %vm1966, %v1947, %v1965
      %vm1968 = vcmp.gt.f32.partialorder %v1911, 1.0
      %v1969 = vsel %vm1968, %v1959, %v1962
      %v1970 = vld [vmem:[#allocation2] sm:$0x1]
      %v1971 = vld [vmem:[%s0] sm:$0x1]
      %vm1972 = vcmp.eq.s32.totalorder %v1971, 1
      %vm1973 = vcmp.eq.s32.totalorder %v1971, 0
      %vm1974 = vcmp.gt.f32.partialorder %v1970, %v1969
      %vm1975 = vmand %vm1972, %vm1974
      %vm1976 = vcmp.lt.f32.partialorder %v1970, %v1967
      %vm1977 = vmand %vm1973, %vm1976
      %v1978 = vmul.f32 %v1970, %v1970
      %v1979 = vsel %vm1975, %v1978, 0.0
      %v1980 = vsel %vm1888, %v1979, 0.0
      %1981 = vadd.xlane.f32.xlu0 %v1980
      %v1982 = vpop.xlane.xlu0 %1981
      %v1983 = vrot.slane %v1982, 4
      %v1984 = vadd.f32 %v1982, %v1983
      %v1985 = vrot.slane %v1984, 2
      %v1986 = vadd.f32 %v1984, %v1985
      %v1987 = vrot.slane %v1986, 1
      %v1988 = vadd.f32 %v1986, %v1987
      %s1989 = vtos %v1988
      %v1990 = vstv %s1989
      %v1991 = vsub.f32 0.5, %v1970
      %v1992 = vmax.f32 %v1991, 0.0
      %v1993 = vmul.f32 %v1992, %v1992
      %v1994 = vsel %vm1977, %v1993, 0.0
      %v1995 = vsel %vm1888, %v1994, 0.0
      %1996 = vadd.xlane.f32.xlu0 %v1995
      %v1997 = vpop.xlane.xlu0 %1996
      %v1998 = vrot.slane %v1997, 4
      %v1999 = vadd.f32 %v1997, %v1998
      %v2000 = vrot.slane %v1999, 2
      %v2001 = vadd.f32 %v1999, %v2000
      %v2002 = vrot.slane %v2001, 1
      %v2003 = vadd.f32 %v2001, %v2002
      %s2004 = vtos %v2003
      %v2005 = vstv %s2004
      %v2006 = vadd.f32 %v1990, %v2005
      %vm2007 = vcmask 0
      %2008 = vst.msk [vmem:[#allocation9] sm:$0x1] %vm2007, %v2006
    $region21: #{tpu_custom_call.1} parent=1 // pred_fallthru
      _
    // Predicated region
    $region22: #{tpu_custom_call.1} parent=1 // pred_check
      _
    $region23: #{tpu_custom_call.1} parent=1 // pred_check_branch
      %2010 = sbr.rel (0) target = $region25
    $region24: #{tpu_custom_call.1} parent=1 // pred_region
      %s2012 = ssub.s32 16, 16
      %2013 = vsyncadd [#allocation10], %s2012
      %s2015 = sshll.u32 [#allocation9], 4
      %s2016 = int_to_ptr.vmem [resolvable:$true] %s2015
      %2018 = dma.vmem_to_hbm [thread:$0]  %s2016, 16, %s3, [#allocation10]
    $region25: #{tpu_custom_call.1} parent=1 // pred_fallthru
      _
    // Predicated region
    $region26: #{tpu_custom_call.1} parent=1 // pred_check
      _
    $region27: #{tpu_custom_call.1} parent=1 // pred_check_branch
      %2020 = sbr.rel (0) target = $region29
    $region28: #{tpu_custom_call.1} parent=1 // pred_region
      %2021 = dma.done [#allocation10], 16
    $region29: #{tpu_custom_call.1} parent=1 // pred_fallthru
      _
    %2022 = vsyncpa [#allocation10], 1

</llo_original>
